<compile_context>
chip_gen: v6e
topology: v6e:2x2x1
jax: 0.10.0
libtpu: 0.0.40
codegen_flags: <defaults>
</compile_context>

<pallas_src>
import functools

import jax
import jax.numpy as jnp
from jax.experimental import pallas as pl
from jax.experimental.pallas import tpu as pltpu


# ---------------------------------------------------------------------------
# Generation-aware VMEM limit and M-tile picker.
# ---------------------------------------------------------------------------
@functools.lru_cache(maxsize=None)
def _vmem_limit_bytes():
    cap = 64 * 1024 * 1024
    try:
        cap = int(pltpu.get_tpu_info().vmem_capacity_bytes)
    except Exception:
        pass
    # ~100 MiB on v5e/v6e (128 MiB VMEM), 56 MiB on v7x (64 MiB per-TC VMEM).
    return min(cap * 7 // 8, 100 * 1024 * 1024)


def _pick_tm(M):
    """M-tile <= cap (pad M up instead of taking the whole M as one block)."""
    cap = 512 if _vmem_limit_bytes() >= 96 * 1024 * 1024 else 256
    if M <= cap:
        return M, M
    return cap, -(-M // cap) * cap


# ---------------------------------------------------------------------------
# Kernel 1: tiled 1x1-conv (matmul) + bias + optional ReLU.
# ---------------------------------------------------------------------------
def _pw_kernel(x_ref, w_ref, b_ref, o_ref, *, relu):
    y = jnp.dot(x_ref[...], w_ref[...], preferred_element_type=jnp.float32)
    y = y + b_ref[...]
    if relu:
        y = jnp.maximum(y, 0.0)
    o_ref[...] = y.astype(o_ref.dtype)


def pointwise_conv(x, w, b, *, relu=False, out_dtype=jnp.float32, tn=1024):
    """x: (M, K) bf16; w: (K, Cout) bf16; b: (Cout,) f32."""
    M, K = x.shape
    Cout = w.shape[1]
    tn = min(tn, Cout)
    assert Cout % tn == 0
    tm, Mp = _pick_tm(M)
    if Mp != M:
        x = jnp.pad(x, ((0, Mp - M), (0, 0)))
    grid = (Mp // tm, Cout // tn)
    out = pl.pallas_call(
        functools.partial(_pw_kernel, relu=relu),
        out_shape=jax.ShapeDtypeStruct((Mp, Cout), out_dtype),
        grid=grid,
        in_specs=[
            pl.BlockSpec((tm, K), lambda i, j: (i, 0)),
            pl.BlockSpec((K, tn), lambda i, j: (0, j)),
            pl.BlockSpec((1, tn), lambda i, j: (0, j)),
        ],
        out_specs=pl.BlockSpec((tm, tn), lambda i, j: (i, j)),
        compiler_params=pltpu.CompilerParams(
            dimension_semantics=("parallel", "parallel"),
            vmem_limit_bytes=_vmem_limit_bytes()),
    )(x, w, b.reshape(1, Cout))
    return out[:M] if Mp != M else out


# ---------------------------------------------------------------------------
# Kernel 2: fused depth head + pose_reduction, two outputs from one kernel.
# Depth columns never share a tile with pose columns: the depth activation
# (exact 1/(10*sigmoid+0.01)) only touches the 128-wide f32 depth output; the
# pose_reduction path (Conv -> ReLU -> BN, matching the nn.Sequential order)
# is written directly as bf16.
# ---------------------------------------------------------------------------
def _head_kernel(x_ref, dw_ref, db_ref, pw_ref, pb_ref, ps_ref, pt_ref,
                 d_ref, r_ref):
    x = x_ref[...]
    # pose_reduction: Conv -> ReLU -> BN  (nn.Sequential order)
    y = jnp.dot(x, pw_ref[...], preferred_element_type=jnp.float32) + pb_ref[...]
    r_ref[...] = (jnp.maximum(y, 0.0) * ps_ref[...] + pt_ref[...]).astype(r_ref.dtype)
    # depth head: 1x1 conv -> depth = 1 / (10*sigmoid(d) + 0.01)  (exact)
    d = jnp.dot(x, dw_ref[...], preferred_element_type=jnp.float32) + db_ref[...]
    d_ref[...] = 1.0 / (10.0 * jax.nn.sigmoid(d) + 0.01)


def fused_head(x, dw, db, pw, pb, ps, pt):
    """x: (M, 2048) bf16 -> (depth (M,128) f32, reds (M,1024) bf16)."""
    M, K = x.shape
    Cd, Cp = dw.shape[1], pw.shape[1]
    tm, Mp = _pick_tm(M)
    if Mp != M:
        x = jnp.pad(x, ((0, Mp - M), (0, 0)))

    def vspec(c):
        return pl.BlockSpec((1, c), lambda i: (0, 0))

    depth, reds = pl.pallas_call(
        _head_kernel,
        out_shape=(jax.ShapeDtypeStruct((Mp, Cd), jnp.float32),
                   jax.ShapeDtypeStruct((Mp, Cp), jnp.bfloat16)),
        grid=(Mp // tm,),
        in_specs=[
            pl.BlockSpec((tm, K), lambda i: (i, 0)),
            pl.BlockSpec((K, Cd), lambda i: (0, 0)), vspec(Cd),
            pl.BlockSpec((K, Cp), lambda i: (0, 0)), vspec(Cp), vspec(Cp), vspec(Cp),
        ],
        out_specs=(pl.BlockSpec((tm, Cd), lambda i: (i, 0)),
                   pl.BlockSpec((tm, Cp), lambda i: (i, 0))),
        compiler_params=pltpu.CompilerParams(
            dimension_semantics=("parallel",),
            vmem_limit_bytes=_vmem_limit_bytes()),
    )(x, dw, db.reshape(1, Cd), pw, pb.reshape(1, Cp),
      ps.reshape(1, Cp), pt.reshape(1, Cp))
    if Mp != M:
        depth, reds = depth[:M], reds[:M]
    return depth, reds


# ---------------------------------------------------------------------------
# Kernel 3: fused pose decoder with scalar-prefetched pair indexing.
# pd0 (1x1) is two K=1024 matmuls against the two halves of pd0_w (no channel
# concat); pd1..pd3 are exact VALID 3x3 convs as single im2col matmuls with
# bf16 intermediates; spatial mean * 0.005 at the end.
# ---------------------------------------------------------------------------
def _conv3x3_im2col(v, w9_ref, b_ref):
    """Exact VALID 3x3 conv: v (B,H,W,Cin) bf16, w9 (9*Cin,Cout) bf16 ->
    (B*(H-2)*(W-2), Cout) f32 and (B, H-2, W-2)."""
    B, H, W, Cin = v.shape
    Ho, Wo = H - 2, W - 2
    taps = [v[:, dy:dy + Ho, dx:dx + Wo, :] for dy in range(3) for dx in range(3)]
    patch = jnp.concatenate(taps, axis=-1).reshape(B * Ho * Wo, 9 * Cin)
    acc = jnp.dot(patch, w9_ref[...], preferred_element_type=jnp.float32)
    return acc + b_ref[...], (B, Ho, Wo)


def _pose_dec_kernel(pi_ref, pj_ref, xi_ref, xj_ref,
                     w0a_ref, w0b_ref, b0_ref, s0_ref, t0_ref,
                     w1_ref, b1_ref, s1_ref, t1_ref,
                     w2_ref, b2_ref, s2_ref, t2_ref,
                     w3_ref, b3_ref, o_ref, *, n, h, w):
    del pi_ref, pj_ref                      # only used by the index_maps
    Cr = xi_ref.shape[-1]
    C0 = w0a_ref.shape[1]
    C3 = w3_ref.shape[1]
    xi = xi_ref[...].reshape(n * h * w, Cr)
    xj = xj_ref[...].reshape(n * h * w, Cr)
    # pd0: 1x1 conv on cat([red_i, red_j], C) == two K=1024 matmuls.
    y = (jnp.dot(xi, w0a_ref[...], preferred_element_type=jnp.float32)
         + jnp.dot(xj, w0b_ref[...], preferred_element_type=jnp.float32)
         + b0_ref[...])
    # Conv -> ReLU -> BN (matches the reference nn.Sequential order)
    y = jnp.maximum(y, 0.0) * s0_ref[...] + t0_ref[...]
    y = y.astype(jnp.bfloat16).reshape(n, h, w, C0)
    # pd1, pd2: VALID 3x3 conv -> ReLU -> BN, bf16 between layers
    for wr, br, sr, tr in ((w1_ref, b1_ref, s1_ref, t1_ref),
                           (w2_ref, b2_ref, s2_ref, t2_ref)):
        acc, (B_, Ho, Wo) = _conv3x3_im2col(y, wr, br)
        acc = jnp.maximum(acc, 0.0) * sr[...] + tr[...]
        y = acc.astype(jnp.bfloat16).reshape(B_, Ho, Wo, C0)
    # pd3: VALID 3x3 conv 256->6 (padded to 128), no activation
    acc, (B3, H3, W3) = _conv3x3_im2col(y, w3_ref, b3_ref)
    # spatial mean over the exact (h-6) x (w-6) valid window, then * 0.005
    pooled = jnp.sum(acc.reshape(B3, H3 * W3, C3), axis=1) * (0.005 / float(H3 * W3))
    o_ref[...] = pooled.reshape(1, B3, C3)


def pose_decoder(reds3, pair_i, pair_j, params, *, n, h, w):
    """reds3: (T, N*h*w, 1024) bf16; pair_i/pair_j: (P,) int32 frame indices.
    Returns (P, N, 128) f32 pose outputs (first 6 channels are real)."""
    assert h >= 7 and w >= 7, "3x VALID 3x3 convs need feature dims >= 7"
    T, Nhw, Cr = reds3.shape
    P = pair_i.shape[0]
    C0 = params['pd0_wa'].shape[1]
    C3 = params['pd3_b'].shape[0]

    def vec(v):
        return v.reshape(1, -1)

    def vspec(c):
        return pl.BlockSpec((1, c), lambda p, pi, pj: (0, 0))

    def wspec(shape):
        return pl.BlockSpec(shape, lambda p, pi, pj: (0,) * len(shape))

    grid_spec = pltpu.PrefetchScalarGridSpec(
        num_scalar_prefetch=2,
        grid=(P,),
        in_specs=[
            pl.BlockSpec((1, Nhw, Cr), lambda p, pi, pj: (pi[p], 0, 0)),
            pl.BlockSpec((1, Nhw, Cr), lambda p, pi, pj: (pj[p], 0, 0)),
            wspec((Cr, C0)), wspec((Cr, C0)),
            vspec(C0), vspec(C0), vspec(C0),
            wspec((9 * C0, C0)), vspec(C0), vspec(C0), vspec(C0),
            wspec((9 * C0, C0)), vspec(C0), vspec(C0), vspec(C0),
            wspec((9 * C0, C3)), vspec(C3),
        ],
        out_specs=pl.BlockSpec((1, n, C3), lambda p, pi, pj: (p, 0, 0)),
    )
    return pl.pallas_call(
        functools.partial(_pose_dec_kernel, n=n, h=h, w=w),
        out_shape=jax.ShapeDtypeStruct((P, n, C3), jnp.float32),
        grid_spec=grid_spec,
        compiler_params=pltpu.CompilerParams(
            dimension_semantics=("parallel",),
            vmem_limit_bytes=_vmem_limit_bytes()),
    )(pair_i, pair_j, reds3, reds3,
      params['pd0_wa'], params['pd0_wb'], vec(params['pd0_b']),
      vec(params['pd0_scale']), vec(params['pd0_shift']),
      params['pd1_w9'], vec(params['pd1_b']),
      vec(params['pd1_scale']), vec(params['pd1_shift']),
      params['pd2_w9'], vec(params['pd2_b']),
      vec(params['pd2_scale']), vec(params['pd2_shift']),
      params['pd3_w9'], vec(params['pd3_b']))


# ---------------------------------------------------------------------------
# Deterministic synthetic parameters (shapes follow SfMModel.__init__).
# Matmul weights stored in bf16; bias/BN params in f32.
# ---------------------------------------------------------------------------
def init_params(key):
    ks = jax.random.split(key, 18)

    def nrm(k, shape, s=0.02):
        return s * jax.random.normal(k, shape, jnp.float32)

    def bn_params(k, c, eps=1e-5):
        k1, k2, k3, k4 = jax.random.split(k, 4)
        gamma = 1.0 + 0.1 * jax.random.normal(k1, (c,), jnp.float32)
        beta = 0.1 * jax.random.normal(k2, (c,), jnp.float32)
        mean = 0.1 * jax.random.normal(k3, (c,), jnp.float32)
        var = 1.0 + 0.1 * jnp.abs(jax.random.normal(k4, (c,), jnp.float32))
        scale = gamma / jnp.sqrt(var + eps)
        return scale, beta - mean * scale

    p = {}
    # encoder stub: 8x8 avg-pool + 1x1 conv (3->2048) folded into one im2col
    # matmul; weight row (c*64 + s) = conv_w[c] / 64, K padded 192 -> 256.
    base = nrm(ks[0], (3, 2048), 0.1)
    enc = jnp.repeat(base, 64, axis=0) / 64.0                 # (192, 2048)
    p['enc_w'] = jnp.pad(enc, ((0, 64), (0, 0))).astype(jnp.bfloat16)
    p['enc_b'] = nrm(ks[1], (2048,), 0.1)

    # depth head: 1x1 conv 2048 -> 1 (output padded to 128 lanes)
    p['depth_w'] = jnp.zeros((2048, 128), jnp.float32).at[:, :1].set(
        nrm(ks[2], (2048, 1), 0.02)).astype(jnp.bfloat16)
    p['depth_b'] = jnp.zeros((128,), jnp.float32).at[:1].set(nrm(ks[3], (1,), 0.02))

    # pose_reduction: Conv2d(2048,1024,1x1) -> ReLU -> BatchNorm2d(1024)
    p['pr_w'] = nrm(ks[4], (2048, 1024), 0.02).astype(jnp.bfloat16)
    p['pr_b'] = nrm(ks[5], (1024,), 0.02)
    p['pr_scale'], p['pr_shift'] = bn_params(ks[6], 1024)

    # pose_decoder
    pd0 = nrm(ks[7], (2048, 256), 0.02).astype(jnp.bfloat16)
    p['pd0_wa'], p['pd0_wb'] = pd0[:1024], pd0[1024:]
    p['pd0_b'] = nrm(ks[8], (256,), 0.02)
    p['pd0_scale'], p['pd0_shift'] = bn_params(ks[9], 256)
    p['pd1_w9'] = nrm(ks[10], (3, 3, 256, 256), 0.02).reshape(9 * 256, 256).astype(jnp.bfloat16)
    p['pd1_b'] = nrm(ks[11], (256,), 0.02)
    p['pd1_scale'], p['pd1_shift'] = bn_params(ks[12], 256)
    p['pd2_w9'] = nrm(ks[13], (3, 3, 256, 256), 0.02).reshape(9 * 256, 256).astype(jnp.bfloat16)
    p['pd2_b'] = nrm(ks[14], (256,), 0.02)
    p['pd2_scale'], p['pd2_shift'] = bn_params(ks[15], 256)
    # final Conv2d(256, 6, 3x3) (output channels zero-padded 6 -> 128)
    p['pd3_w9'] = jnp.zeros((3, 3, 256, 128), jnp.float32).at[..., :6].set(
        nrm(ks[16], (3, 3, 256, 6), 0.02)).reshape(9 * 256, 128).astype(jnp.bfloat16)
    p['pd3_b'] = jnp.zeros((128,), jnp.float32).at[:6].set(nrm(ks[17], (6,), 0.02))
    return p


# ---------------------------------------------------------------------------
# Forward pass mirroring SfMModel.forward / get_depth_and_poses_from_features.
# ---------------------------------------------------------------------------
def sfm_forward(images, intrinsics, params, neighbor_range=1):
    T = len(images)
    N, C, H, W = images[0].shape
    assert H % 8 == 0 and W % 8 == 0
    h, w = H // 8, W // 8
    M = T * N * h * w
    Kp = params['enc_w'].shape[0]
    assert C * 64 <= Kp

    # ---- encoder stub, all T frames batched into ONE pallas_call ----------
    # 8x8 avg-pool + 1x1 conv as im2col: (M, 3*64) patches, pool factor in weight.
    imgs = jnp.stack(images, axis=0).reshape(T * N, C, h, 8, w, 8)
    x = jnp.transpose(imgs, (0, 2, 4, 1, 3, 5)).reshape(M, C * 64)
    x = jnp.pad(x, ((0, 0), (0, Kp - C * 64))).astype(jnp.bfloat16)
    feats = pointwise_conv(x, params['enc_w'], params['enc_b'],
                           relu=True, out_dtype=jnp.bfloat16, tn=1024)

    # ---- fused depth head + pose_reduction, two outputs from ONE call -----
    depth, reds = fused_head(feats, params['depth_w'], params['depth_b'],
                             params['pr_w'], params['pr_b'],
                             params['pr_scale'], params['pr_shift'])
    depth = depth[:, :1].reshape(T, N, h, w, 1)
    depths = [jnp.transpose(depth[t], (0, 3, 1, 2)) for t in range(T)]   # (N,1,h,w)
    reds3 = reds.reshape(T, N * h * w, 1024)                              # bf16

    # ---- pose decoder, all (i, j) neighbor pairs in ONE prefetch-indexed call
    pairs = [(i, j) for i in range(T) for j in range(T)
             if i != j and abs(i - j) <= neighbor_range]
    poses = [[[] for _ in range(T)] for _ in range(T)]
    if pairs:
        pair_i = jnp.asarray([p[0] for p in pairs], jnp.int32)
        pair_j = jnp.asarray([p[1] for p in pairs], jnp.int32)
        pose_out = pose_decoder(reds3, pair_i, pair_j, params, n=N, h=h, w=w)
        for idx, (i, j) in enumerate(pairs):
            poses[i][j] = pose_out[idx, :, :6]                            # (N, 6)

    return depths, poses, [intrinsics for _ in range(T)]


if __name__ == "__main__":
    key = jax.random.PRNGKey(0)
    k_img0, k_img1, k_par = jax.random.split(key, 3)

    T = 2                       # two frames -> poses (0,1) and (1,0)
    N, C, H, W = 2, 3, 64, 64
    images = [jax.random.normal(k_img0, (N, C, H, W), jnp.float32),
              jax.random.normal(k_img1, (N, C, H, W), jnp.float32)]
    intrinsics = jnp.tile(jnp.eye(3, dtype=jnp.float32)[None], (N, 1, 1))

    params = init_params(k_par)

    depths, poses, intr_list = sfm_forward(images, intrinsics, params,
                                           neighbor_range=1)
    jax.block_until_ready((depths, poses, intr_list))

    assert len(depths) == T and depths[0].shape == (N, 1, H // 8, W // 8)
    assert poses[0][1].shape == (N, 6) and poses[1][0].shape == (N, 6)
    assert poses[0][0] == [] and poses[1][1] == []
    assert all(bool(jnp.isfinite(d).all()) for d in depths)
    assert bool(jnp.isfinite(poses[0][1]).all())
    assert bool(jnp.isfinite(poses[1][0]).all())
    print("KERNEL_OK")
</pallas_src>

<mosaic_0001>
module attributes {stable_mosaic.version = 11 : i64} {
  func.func @_pw_kernel(%arg0: i32, %arg1: i32, %arg2: memref<256x256xbf16, #tpu.memory_space<vmem>>, %arg3: memref<256x1024xbf16, #tpu.memory_space<vmem>>, %arg4: memref<1x1024xf32, #tpu.memory_space<vmem>>, %arg5: memref<256x1024xbf16, #tpu.memory_space<vmem>>) attributes {dimension_semantics = [#tpu.dimension_semantics<parallel>, #tpu.dimension_semantics<parallel>], iteration_bounds = array<i64: 1, 2>, scalar_prefetch = 0 : i64, scratch_operands = 0 : i64, tpu.core_type = #tpu.core_type<tc>, window_params = [{transform_indices = @transform_0, window_bounds = array<i64: 256, 256>}, {transform_indices = @transform_1, window_bounds = array<i64: 256, 1024>}, {transform_indices = @transform_2, window_bounds = array<i64: 1, 1024>}, {transform_indices = @transform_3, window_bounds = array<i64: 256, 1024>}]} {
    %c0 = arith.constant 0 : index
    %c0_0 = arith.constant 0 : index
    %0 = vector.load %arg2[%c0, %c0_0] : memref<256x256xbf16, #tpu.memory_space<vmem>>, vector<256x256xbf16>
    %c0_1 = arith.constant 0 : index
    %c0_2 = arith.constant 0 : index
    %1 = vector.load %arg3[%c0_1, %c0_2] : memref<256x1024xbf16, #tpu.memory_space<vmem>>, vector<256x1024xbf16>
    %cst = arith.constant dense<0.000000e+00> : vector<256x1024xf32>
    %2 = tpu.matmul %0, %1, %cst {dimension_numbers = #tpu.dot_dimension_numbers<[1], [0], [0], [1], [0, 0, 1, 1], [], []>} : vector<256x256xbf16>, vector<256x1024xbf16>, vector<256x1024xf32> -> vector<256x1024xf32>
    %c0_3 = arith.constant 0 : index
    %c0_4 = arith.constant 0 : index
    %3 = vector.load %arg4[%c0_3, %c0_4] : memref<1x1024xf32, #tpu.memory_space<vmem>>, vector<1x1024xf32>
    %4 = vector.broadcast %3 : vector<1x1024xf32> to vector<256x1024xf32>
    %5 = arith.addf %2, %4 : vector<256x1024xf32>
    %cst_5 = arith.constant 0.000000e+00 : f32
    %6 = vector.broadcast %cst_5 : f32 to vector<256x1024xf32>
    %7 = arith.maximumf %5, %6 : vector<256x1024xf32>
    %8 = arith.truncf %7 : vector<256x1024xf32> to vector<256x1024xbf16>
    %c0_6 = arith.constant 0 : index
    %c0_7 = arith.constant 0 : index
    %9 = vector.load %arg5[%c0_6, %c0_7] : memref<256x1024xbf16, #tpu.memory_space<vmem>>, vector<256x1024xbf16>
    tpu.vector_store %arg5[%c0_6, %c0_7], %8 {strides = array<i32>} : memref<256x1024xbf16, #tpu.memory_space<vmem>>, vector<256x1024xbf16>,
    return
  }
  func.func @transform_0(%arg0: i32, %arg1: i32) -> (i32, i32) {
    %c0_i32 = arith.constant 0 : i32
    %c0_i32_0 = arith.constant 0 : i32
    return %arg0, %c0_i32 : i32, i32
  }
  func.func @transform_1(%arg0: i32, %arg1: i32) -> (i32, i32) {
    %c0_i32 = arith.constant 0 : i32
    %c0_i32_0 = arith.constant 0 : i32
    return %c0_i32, %arg1 : i32, i32
  }
  func.func @transform_2(%arg0: i32, %arg1: i32) -> (i32, i32) {
    %c0_i32 = arith.constant 0 : i32
    %c0_i32_0 = arith.constant 0 : i32
    return %c0_i32, %arg1 : i32, i32
  }
  func.func @transform_3(%arg0: i32, %arg1: i32) -> (i32, i32) {
    %c0_i32 = arith.constant 0 : i32
    return %arg0, %arg1 : i32, i32
  }
}

</mosaic_0001>

<llo_original>
// kernel: tpu_custom_call.1
$region0: #{tpu_custom_call.1}
  #allocation0 [shape = 'u32[]', space=smem, size = 0x4, offset = 0x4, fixed_abs, tag = 'smem constant byte address 0x4 - core index']
  #allocation1 [shape = 'u32[144,128]{1,0:T(1,128)}', space=vmem, size = 0x12000, scoped, tag = 'internal scratch']
  %s0 = inlined_call_operand.hbm [shape: bf16[256,256], index: 0, kind: input, shape index: {}]
  %s1 = inlined_call_operand.hbm [shape: bf16[256,2048], index: 1, kind: input, shape index: {}]
  %s2 = inlined_call_operand.hbm [shape: f32[1,2048], index: 2, kind: input, shape index: {}]
  %s3 = inlined_call_operand.hbm [shape: bf16[256,2048], index: 3, kind: output, shape index: {}]
  %s4 = sld [smem:[#allocation0]]
  $region57: #{tpu_custom_call.1} parent=0
    _
  %s6 = ssub.s32 1, %s4
  %s7 = scalar_select 0, %s6, %s4
  $region1: #{tpu_custom_call.1} parent=0
    #allocation2 [shape = 'u8[131072]{0}', space=vmem, size = 0x20000, scoped, tag = 'input window, operand 0, single buffered']
    #allocation3 [shape = 's32[2]{0}', space=sflag, size = 0x8, scoped, tag = 'scoped memory for tpu_custom_call.1']
    #allocation4 [shape = 's32[2]{0}', space=sflag, size = 0x8, scoped, tag = 'scoped memory for tpu_custom_call.1']
    #allocation5 [shape = 'u8[1048576]{0}', space=vmem, size = 0x100000, scoped, tag = 'input window, operand 1']
    #allocation6 [shape = 's32[2]{0}', space=sflag, size = 0x8, scoped, tag = 'scoped memory for tpu_custom_call.1']
    #allocation7 [shape = 'u8[8192]{0}', space=vmem, size = 0x2000, scoped, tag = 'input window, operand 2']
    #allocation8 [shape = 'u8[1048576]{0}', space=vmem, size = 0x100000, scoped, tag = 'output window, operand 0']
    %8 = vsyncpa [#allocation3], 0
    %9 = vsyncpa [#allocation6], 0
    %s10 = scalar_lea.sflag [#allocation6], 1
    %11 = vsyncpa %s10, 0
    %12 = vsyncpa [#allocation4], 0
    %s13 = scalar_lea.sflag [#allocation4], 1
    %14 = vsyncpa %s13, 0
    loop: start=0, step=1, limit=4
    $region2: #{tpu_custom_call.1} parent=1 // loop_pre_header
      _
    $region3: #{tpu_custom_call.1} parent=1 // loop_header
      %s16 = sphi 0, %s20
      %p17 = scmp.ge.s32.totalorder %s16, 4
      %s23 = sphi 0, %s35
      %s24 = sphi 0, %s31
      %s25 = sphi 0, %s23
      %s26 = sphi 0, %s24
      %s27 = sphi 0, %s25
      %s28 = sphi 0, %s26
      %s38 = sphi 0, %s40
      %s41 = sphi 0, %s38
      %s42 = sphi 0, %s41
      %s58 = sphi 0, %s42
      %s64 = sphi 0, %s66
      %s67 = sphi 0, %s64
      %s68 = sphi 0, %s67
      %s84 = sphi 0, %s68
      %s90 = sphi 0, %s92
      %s93 = sphi 0, %s90
      %s94 = sphi 0, %s93
      %s110 = sphi 0, %s94
      %s118 = sphi 0, %s120
      %s121 = sphi 0, %s118
      %s122 = sphi 0, %s121
      %s138 = sphi 0, %s122
    $region4: #{tpu_custom_call.1} parent=1 // loop_header_branch
      %19 = sbr.rel (%p17) target = $region8
    $region5: #{tpu_custom_call.1} parent=1 // loop_body
      %s21 = ssub.s32 %s16, 1
      %s22 = ssub.s32 %s16, 2
      %s29 = sadd.s32 1, %s24
      %p30 = scmp.ge.s32.totalorder %s29, 2
      %s31 = scalar_select %p30, 0, %s29
      %s32 = sadd.s32 1, %s23
      %s33 = scalar_select %p30, %s32, %s23
      %p34 = scmp.ge.s32.totalorder %s33, 1
      %s35 = scalar_select %p34, 0, %s33
      %s36 = ssub.s32 %s23, %s35
      %p37 = scmp.eq.s32.totalorder %s36, 0
      %s39 = sadd.s32 %s38, 1
      %s40 = scalar_select %p37, %s38, %s39
      %p43 = pneg %p37
      %p44 = scmp.eq.s32.totalorder %s16, 1
      %p45 = por %p43, %p44
      %p46 = scmp.ne.s32.totalorder %s38, %s41
      %p47 = scmp.eq.s32.totalorder %s16, 0
      %p48 = por %p46, %p47
      %p49 = scmp.ne.s32.totalorder %s38, %s41
      %p50 = scmp.eq.s32.totalorder %s21, 1
      %p51 = por %p49, %p50
      %p52 = scmp.ne.s32.totalorder %s41, %s42
      %p53 = scmp.eq.s32.totalorder %s21, 0
      %p54 = por %p52, %p53
      %p55 = scmp.ne.s32.totalorder %s41, %s42
      %p56 = scmp.eq.s32.totalorder %s22, 1
      %p57 = por %p55, %p56
      %p59 = scmp.ne.s32.totalorder %s42, %s58
      %p60 = scmp.eq.s32.totalorder %s22, 0
      %p61 = por %p59, %p60
      %s62 = ssub.s32 %s24, %s31
      %p63 = scmp.eq.s32.totalorder %s62, 0
      %s65 = sadd.s32 %s64, 1
      %s66 = scalar_select %p63, %s64, %s65
      %p69 = pneg %p63
      %p70 = scmp.eq.s32.totalorder %s16, 1
      %p71 = por %p69, %p70
      %p72 = scmp.ne.s32.totalorder %s64, %s67
      %p73 = scmp.eq.s32.totalorder %s16, 0
      %p74 = por %p72, %p73
      %p75 = scmp.ne.s32.totalorder %s64, %s67
      %p76 = scmp.eq.s32.totalorder %s21, 1
      %p77 = por %p75, %p76
      %p78 = scmp.ne.s32.totalorder %s67, %s68
      %p79 = scmp.eq.s32.totalorder %s21, 0
      %p80 = por %p78, %p79
      %p81 = scmp.ne.s32.totalorder %s67, %s68
      %p82 = scmp.eq.s32.totalorder %s22, 1
      %p83 = por %p81, %p82
      %p85 = scmp.ne.s32.totalorder %s68, %s84
      %p86 = scmp.eq.s32.totalorder %s22, 0
      %p87 = por %p85, %p86
      %s88 = ssub.s32 %s24, %s31
      %p89 = scmp.eq.s32.totalorder %s88, 0
      %s91 = sadd.s32 %s90, 1
      %s92 = scalar_select %p89, %s90, %s91
      %p95 = pneg %p89
      %p96 = scmp.eq.s32.totalorder %s16, 1
      %p97 = por %p95, %p96
      %p98 = scmp.ne.s32.totalorder %s90, %s93
      %p99 = scmp.eq.s32.totalorder %s16, 0
      %p100 = por %p98, %p99
      %p101 = scmp.ne.s32.totalorder %s90, %s93
      %p102 = scmp.eq.s32.totalorder %s21, 1
      %p103 = por %p101, %p102
      %p104 = scmp.ne.s32.totalorder %s93, %s94
      %p105 = scmp.eq.s32.totalorder %s21, 0
      %p106 = por %p104, %p105
      %p107 = scmp.ne.s32.totalorder %s93, %s94
      %p108 = scmp.eq.s32.totalorder %s22, 1
      %p109 = por %p107, %p108
      %p111 = scmp.ne.s32.totalorder %s94, %s110
      %p112 = scmp.eq.s32.totalorder %s22, 0
      %p113 = por %p111, %p112
      %s114 = ssub.s32 %s23, %s35
      %s115 = ssub.s32 %s24, %s31
      %s116 = sor.u32 %s114, %s115
      %p117 = scmp.eq.s32.totalorder %s116, 0
      %s119 = sadd.s32 %s118, 1
      %s120 = scalar_select %p117, %s118, %s119
      %p123 = pneg %p117
      %p124 = scmp.eq.s32.totalorder %s16, 1
      %p125 = por %p123, %p124
      %p126 = scmp.ne.s32.totalorder %s118, %s121
      %p127 = scmp.eq.s32.totalorder %s16, 0
      %p128 = por %p126, %p127
      %p129 = scmp.ne.s32.totalorder %s118, %s121
      %p130 = scmp.eq.s32.totalorder %s21, 1
      %p131 = por %p129, %p130
      %p132 = scmp.ne.s32.totalorder %s121, %s122
      %p133 = scmp.eq.s32.totalorder %s21, 0
      %p134 = por %p132, %p133
      %p135 = scmp.ne.s32.totalorder %s121, %s122
      %p136 = scmp.eq.s32.totalorder %s22, 1
      %p137 = por %p135, %p136
      %p139 = scmp.ne.s32.totalorder %s122, %s138
      %p140 = scmp.eq.s32.totalorder %s22, 0
      %p141 = por %p139, %p140
      %p142 = scmp.le.s32.totalorder 1, %s16
      %p143 = scmp.lt.s32.totalorder %s16, 3
      %p144 = pnand %p142, %p143
      %p145 = pneg %p144
      // Predicated region
      $region9: #{tpu_custom_call.1} parent=5 // pred_check
        _
      $region10: #{tpu_custom_call.1} parent=5 // pred_check_branch
        %147 = sbr.rel (%p144) target = $region12
      $region11: #{tpu_custom_call.1} parent=5 // pred_region
        %s148 = ssub.s32 %s16, 1
        // Predicated region
        $region13: #{tpu_custom_call.1} parent=11 // pred_check
          %p149 = pneg %p54
        $region14: #{tpu_custom_call.1} parent=11 // pred_check_branch
          %151 = sbr.rel (%p149) target = $region16
        $region15: #{tpu_custom_call.1} parent=11 // pred_region
          %s152 = smul.u32 32, %s25
          %s154 = ssub.s32 4096, 4096
          %155 = vsyncadd [#allocation3], %s154
          %s156 = smul.addr %s152, 2
          %s157 = smul.addr %s156, 64
          %s158 = scalar_lea.hbm %s0, %s157
          %s159 = sshll.u32 [#allocation2], 4
          %s160 = int_to_ptr.vmem [resolvable:$true] %s159
          %165 = dma.hbm_to_vmem [thread:$0]  %s158, 4096, %s160, [#allocation3], 128, 128, 8
        $region16: #{tpu_custom_call.1} parent=11 // pred_fallthru
          _
      $region12: #{tpu_custom_call.1} parent=5 // pred_fallthru
        _
      %p166 = scmp.lt.s32.totalorder %s16, 2
      // Predicated region
      $region17: #{tpu_custom_call.1} parent=5 // pred_check
        %p167 = pneg %p166
      $region18: #{tpu_custom_call.1} parent=5 // pred_check_branch
        %169 = sbr.rel (%p167) target = $region20
      $region19: #{tpu_custom_call.1} parent=5 // pred_region
        // Predicated region
        $region21: #{tpu_custom_call.1} parent=19 // pred_check
          %p170 = pneg %p74
        $region22: #{tpu_custom_call.1} parent=19 // pred_check_branch
          %172 = sbr.rel (%p170) target = $region24
        $region23: #{tpu_custom_call.1} parent=19 // pred_region
          %s173 = sand.u32 %s16, 1
          %s174 = scalar_lea.sflag [#allocation6], %s173
          %s175 = sand.u32 %s64, 1
          %s176 = smul.addr %s175, 1024
          %s177 = scalar_lea.vmem [#allocation5], %s176
          %s178 = smul.u32 8, %s24
          %s180 = ssub.s32 16384, 16384
          %181 = vsyncadd %s174, %s180
          %s182 = smul.addr %s178, 64
          %s183 = scalar_lea.hbm %s1, %s182
          %s184 = sshll.u32 %s177, 4
          %s185 = int_to_ptr.vmem [resolvable:$true] %s184
          %190 = dma.hbm_to_vmem [thread:$0]  %s183, 16384, %s185, %s174, 1024, 512, 32
        $region24: #{tpu_custom_call.1} parent=19 // pred_fallthru
          _
        // Predicated region
        $region25: #{tpu_custom_call.1} parent=19 // pred_check
          %p191 = pneg %p100
        $region26: #{tpu_custom_call.1} parent=19 // pred_check_branch
          %193 = sbr.rel (%p191) target = $region28
        $region27: #{tpu_custom_call.1} parent=19 // pred_region
          %s194 = sand.u32 %s16, 1
          %s195 = scalar_lea.sflag [#allocation6], %s194
          %s196 = sand.u32 %s90, 1
          %s197 = smul.addr %s196, 8
          %s198 = scalar_lea.vmem [#allocation7], %s197
          %s199 = smul.u32 8, %s24
          %s201 = ssub.s32 128, 128
          %202 = vsyncadd %s195, %s201
          %s203 = smul.addr %s199, 16
          %s204 = scalar_lea.hbm %s2, %s203
          %s206 = sshll.u32 %s198, 4
          %s207 = int_to_ptr.vmem [resolvable:$true] %s206
          %209 = dma.hbm_to_vmem [thread:$0]  %s204, 128, %s207, %s195
        $region28: #{tpu_custom_call.1} parent=19 // pred_fallthru
          _
      $region20: #{tpu_custom_call.1} parent=5 // pred_fallthru
        _
      %p210 = scmp.le.s32.totalorder 1, %s16
      %p211 = scmp.lt.s32.totalorder %s16, 3
      %p212 = pnand %p210, %p211
      %p213 = pneg %p212
      // Predicated region
      $region29: #{tpu_custom_call.1} parent=5 // pred_check
        _
      $region30: #{tpu_custom_call.1} parent=5 // pred_check_branch
        %215 = sbr.rel (%p212) target = $region32
      $region31: #{tpu_custom_call.1} parent=5 // pred_region
        %s216 = ssub.s32 %s16, 1
        // Predicated region
        $region33: #{tpu_custom_call.1} parent=31 // pred_check
          %p217 = pneg %p54
        $region34: #{tpu_custom_call.1} parent=31 // pred_check_branch
          %219 = sbr.rel (%p217) target = $region36
        $region35: #{tpu_custom_call.1} parent=31 // pred_region
          %220 = dma.done [#allocation3], 4096
        $region36: #{tpu_custom_call.1} parent=31 // pred_fallthru
          _
        %s221 = sand.u32 %s21, 1
        %s222 = scalar_lea.sflag [#allocation6], %s221
        %s223 = sand.u32 %s67, 1
        %s224 = smul.addr %s223, 1024
        %s225 = scalar_lea.vmem [#allocation5], %s224
        // Predicated region
        $region37: #{tpu_custom_call.1} parent=31 // pred_check
          %p226 = pneg %p80
        $region38: #{tpu_custom_call.1} parent=31 // pred_check_branch
          %228 = sbr.rel (%p226) target = $region40
        $region39: #{tpu_custom_call.1} parent=31 // pred_region
          %229 = dma.done %s222, 16384
        $region40: #{tpu_custom_call.1} parent=31 // pred_fallthru
          _
        %s230 = sand.u32 %s21, 1
        %s231 = scalar_lea.sflag [#allocation6], %s230
        %s232 = sand.u32 %s93, 1
        %s233 = smul.addr %s232, 8
        %s234 = scalar_lea.vmem [#allocation7], %s233
        // Predicated region
        $region41: #{tpu_custom_call.1} parent=31 // pred_check
          %p235 = pneg %p106
        $region42: #{tpu_custom_call.1} parent=31 // pred_check_branch
          %237 = sbr.rel (%p235) target = $region44
        $region43: #{tpu_custom_call.1} parent=31 // pred_region
          %238 = dma.done %s231, 128
        $region44: #{tpu_custom_call.1} parent=31 // pred_fallthru
          _
        %p239 = pneg %p54
        %p240 = pneg %p51
        %s241 = sand.u32 %s21, 1
        %s242 = scalar_lea.sflag [#allocation6], %s241
        %s243 = sand.u32 %s67, 1
        %s244 = smul.addr %s243, 1024
        %s245 = scalar_lea.vmem [#allocation5], %s244
        %p246 = pneg %p80
        %p247 = pneg %p77
        %s248 = sand.u32 %s21, 1
        %s249 = scalar_lea.sflag [#allocation6], %s248
        %s250 = sand.u32 %s93, 1
        %s251 = smul.addr %s250, 8
        %s252 = scalar_lea.vmem [#allocation7], %s251
        %p253 = pneg %p106
        %p254 = pneg %p103
        %p255 = pneg %p134
        %p256 = pneg %p131
        %s257 = sand.u32 %s121, 1
        %s258 = scalar_lea.sflag [#allocation4], %s257
        %s259 = sand.u32 %s121, 1
        %s260 = smul.addr %s259, 1024
        %s261 = scalar_lea.vmem [#allocation8], %s260
        %s262 = smul.u32 32, %s25
        %s263 = smul.u32 8, %s26
        %s264 = smul.u32 8, %s26
        %s265 = smul.u32 32, %s25
        %s266 = smul.u32 8, %s26
        %v267 = vld [vmem:[#allocation2] sm:$0xff]
        %v268 = vld [vmem:[#allocation2 + $0x8] sm:$0xff]
        %v269 = vld [vmem:[#allocation2 + $0x10] sm:$0xff]
        %v270 = vld [vmem:[#allocation2 + $0x18] sm:$0xff]
        %v271 = vld [vmem:[#allocation2 + $0x20] sm:$0xff]
        %v272 = vld [vmem:[#allocation2 + $0x28] sm:$0xff]
        %v273 = vld [vmem:[#allocation2 + $0x30] sm:$0xff]
        %v274 = vld [vmem:[#allocation2 + $0x38] sm:$0xff]
        %v275 = vld [vmem:[#allocation2 + $0x40] sm:$0xff]
        %v276 = vld [vmem:[#allocation2 + $0x48] sm:$0xff]
        %v277 = vld [vmem:[#allocation2 + $0x50] sm:$0xff]
        %v278 = vld [vmem:[#allocation2 + $0x58] sm:$0xff]
        %v279 = vld [vmem:[#allocation2 + $0x60] sm:$0xff]
        %v280 = vld [vmem:[#allocation2 + $0x68] sm:$0xff]
        %v281 = vld [vmem:[#allocation2 + $0x70] sm:$0xff]
        %v282 = vld [vmem:[#allocation2 + $0x78] sm:$0xff]
        %v283 = vld [vmem:[#allocation2 + $0x80] sm:$0xff]
        %v284 = vld [vmem:[#allocation2 + $0x88] sm:$0xff]
        %v285 = vld [vmem:[#allocation2 + $0x90] sm:$0xff]
        %v286 = vld [vmem:[#allocation2 + $0x98] sm:$0xff]
        %v287 = vld [vmem:[#allocation2 + $0xa0] sm:$0xff]
        %v288 = vld [vmem:[#allocation2 + $0xa8] sm:$0xff]
        %v289 = vld [vmem:[#allocation2 + $0xb0] sm:$0xff]
        %v290 = vld [vmem:[#allocation2 + $0xb8] sm:$0xff]
        %v291 = vld [vmem:[#allocation2 + $0xc0] sm:$0xff]
        %v292 = vld [vmem:[#allocation2 + $0xc8] sm:$0xff]
        %v293 = vld [vmem:[#allocation2 + $0xd0] sm:$0xff]
        %v294 = vld [vmem:[#allocation2 + $0xd8] sm:$0xff]
        %v295 = vld [vmem:[#allocation2 + $0xe0] sm:$0xff]
        %v296 = vld [vmem:[#allocation2 + $0xe8] sm:$0xff]
        %v297 = vld [vmem:[#allocation2 + $0xf0] sm:$0xff]
        %v298 = vld [vmem:[#allocation2 + $0xf8] sm:$0xff]
        %v299 = vld [vmem:[%s225] sm:$0xff]
        %v300 = vld [vmem:[%s225 + $0x8] sm:$0xff]
        %v301 = vld [vmem:[%s225 + $0x10] sm:$0xff]
        %v302 = vld [vmem:[%s225 + $0x18] sm:$0xff]
        %v303 = vld [vmem:[%s225 + $0x20] sm:$0xff]
        %v304 = vld [vmem:[%s225 + $0x28] sm:$0xff]
        %v305 = vld [vmem:[%s225 + $0x30] sm:$0xff]
        %v306 = vld [vmem:[%s225 + $0x38] sm:$0xff]
        %v307 = vld [vmem:[%s225 + $0x40] sm:$0xff]
        %v308 = vld [vmem:[%s225 + $0x48] sm:$0xff]
        %v309 = vld [vmem:[%s225 + $0x50] sm:$0xff]
        %v310 = vld [vmem:[%s225 + $0x58] sm:$0xff]
        %v311 = vld [vmem:[%s225 + $0x60] sm:$0xff]
        %v312 = vld [vmem:[%s225 + $0x68] sm:$0xff]
        %v313 = vld [vmem:[%s225 + $0x70] sm:$0xff]
        %v314 = vld [vmem:[%s225 + $0x78] sm:$0xff]
        %v315 = vld [vmem:[%s225 + $0x80] sm:$0xff]
        %v316 = vld [vmem:[%s225 + $0x88] sm:$0xff]
        %v317 = vld [vmem:[%s225 + $0x90] sm:$0xff]
        %v318 = vld [vmem:[%s225 + $0x98] sm:$0xff]
        %v319 = vld [vmem:[%s225 + $0xa0] sm:$0xff]
        %v320 = vld [vmem:[%s225 + $0xa8] sm:$0xff]
        %v321 = vld [vmem:[%s225 + $0xb0] sm:$0xff]
        %v322 = vld [vmem:[%s225 + $0xb8] sm:$0xff]
        %v323 = vld [vmem:[%s225 + $0xc0] sm:$0xff]
        %v324 = vld [vmem:[%s225 + $0xc8] sm:$0xff]
        %v325 = vld [vmem:[%s225 + $0xd0] sm:$0xff]
        %v326 = vld [vmem:[%s225 + $0xd8] sm:$0xff]
        %v327 = vld [vmem:[%s225 + $0xe0] sm:$0xff]
        %v328 = vld [vmem:[%s225 + $0xe8] sm:$0xff]
        %v329 = vld [vmem:[%s225 + $0xf0] sm:$0xff]
        %v330 = vld [vmem:[%s225 + $0xf8] sm:$0xff]
        %v331 = vld [vmem:[%s225 + $0x100] sm:$0xff]
        %v332 = vld [vmem:[%s225 + $0x108] sm:$0xff]
        %v333 = vld [vmem:[%s225 + $0x110] sm:$0xff]
        %v334 = vld [vmem:[%s225 + $0x118] sm:$0xff]
        %v335 = vld [vmem:[%s225 + $0x120] sm:$0xff]
        %v336 = vld [vmem:[%s225 + $0x128] sm:$0xff]
        %v337 = vld [vmem:[%s225 + $0x130] sm:$0xff]
        %v338 = vld [vmem:[%s225 + $0x138] sm:$0xff]
        %v339 = vld [vmem:[%s225 + $0x140] sm:$0xff]
        %v340 = vld [vmem:[%s225 + $0x148] sm:$0xff]
        %v341 = vld [vmem:[%s225 + $0x150] sm:$0xff]
        %v342 = vld [vmem:[%s225 + $0x158] sm:$0xff]
        %v343 = vld [vmem:[%s225 + $0x160] sm:$0xff]
        %v344 = vld [vmem:[%s225 + $0x168] sm:$0xff]
        %v345 = vld [vmem:[%s225 + $0x170] sm:$0xff]
        %v346 = vld [vmem:[%s225 + $0x178] sm:$0xff]
        %v347 = vld [vmem:[%s225 + $0x180] sm:$0xff]
        %v348 = vld [vmem:[%s225 + $0x188] sm:$0xff]
        %v349 = vld [vmem:[%s225 + $0x190] sm:$0xff]
        %v350 = vld [vmem:[%s225 + $0x198] sm:$0xff]
        %v351 = vld [vmem:[%s225 + $0x1a0] sm:$0xff]
        %v352 = vld [vmem:[%s225 + $0x1a8] sm:$0xff]
        %v353 = vld [vmem:[%s225 + $0x1b0] sm:$0xff]
        %v354 = vld [vmem:[%s225 + $0x1b8] sm:$0xff]
        %v355 = vld [vmem:[%s225 + $0x1c0] sm:$0xff]
        %v356 = vld [vmem:[%s225 + $0x1c8] sm:$0xff]
        %v357 = vld [vmem:[%s225 + $0x1d0] sm:$0xff]
        %v358 = vld [vmem:[%s225 + $0x1d8] sm:$0xff]
        %v359 = vld [vmem:[%s225 + $0x1e0] sm:$0xff]
        %v360 = vld [vmem:[%s225 + $0x1e8] sm:$0xff]
        %v361 = vld [vmem:[%s225 + $0x1f0] sm:$0xff]
        %v362 = vld [vmem:[%s225 + $0x1f8] sm:$0xff]
        %v363 = vld [vmem:[%s225 + $0x200] sm:$0xff]
        %v364 = vld [vmem:[%s225 + $0x208] sm:$0xff]
        %v365 = vld [vmem:[%s225 + $0x210] sm:$0xff]
        %v366 = vld [vmem:[%s225 + $0x218] sm:$0xff]
        %v367 = vld [vmem:[%s225 + $0x220] sm:$0xff]
        %v368 = vld [vmem:[%s225 + $0x228] sm:$0xff]
        %v369 = vld [vmem:[%s225 + $0x230] sm:$0xff]
        %v370 = vld [vmem:[%s225 + $0x238] sm:$0xff]
        %v371 = vld [vmem:[%s225 + $0x240] sm:$0xff]
        %v372 = vld [vmem:[%s225 + $0x248] sm:$0xff]
        %v373 = vld [vmem:[%s225 + $0x250] sm:$0xff]
        %v374 = vld [vmem:[%s225 + $0x258] sm:$0xff]
        %v375 = vld [vmem:[%s225 + $0x260] sm:$0xff]
        %v376 = vld [vmem:[%s225 + $0x268] sm:$0xff]
        %v377 = vld [vmem:[%s225 + $0x270] sm:$0xff]
        %v378 = vld [vmem:[%s225 + $0x278] sm:$0xff]
        %v379 = vld [vmem:[%s225 + $0x280] sm:$0xff]
        %v380 = vld [vmem:[%s225 + $0x288] sm:$0xff]
        %v381 = vld [vmem:[%s225 + $0x290] sm:$0xff]
        %v382 = vld [vmem:[%s225 + $0x298] sm:$0xff]
        %v383 = vld [vmem:[%s225 + $0x2a0] sm:$0xff]
        %v384 = vld [vmem:[%s225 + $0x2a8] sm:$0xff]
        %v385 = vld [vmem:[%s225 + $0x2b0] sm:$0xff]
        %v386 = vld [vmem:[%s225 + $0x2b8] sm:$0xff]
        %v387 = vld [vmem:[%s225 + $0x2c0] sm:$0xff]
        %v388 = vld [vmem:[%s225 + $0x2c8] sm:$0xff]
        %v389 = vld [vmem:[%s225 + $0x2d0] sm:$0xff]
        %v390 = vld [vmem:[%s225 + $0x2d8] sm:$0xff]
        %v391 = vld [vmem:[%s225 + $0x2e0] sm:$0xff]
        %v392 = vld [vmem:[%s225 + $0x2e8] sm:$0xff]
        %v393 = vld [vmem:[%s225 + $0x2f0] sm:$0xff]
        %v394 = vld [vmem:[%s225 + $0x2f8] sm:$0xff]
        %v395 = vld [vmem:[%s225 + $0x300] sm:$0xff]
        %v396 = vld [vmem:[%s225 + $0x308] sm:$0xff]
        %v397 = vld [vmem:[%s225 + $0x310] sm:$0xff]
        %v398 = vld [vmem:[%s225 + $0x318] sm:$0xff]
        %v399 = vld [vmem:[%s225 + $0x320] sm:$0xff]
        %v400 = vld [vmem:[%s225 + $0x328] sm:$0xff]
        %v401 = vld [vmem:[%s225 + $0x330] sm:$0xff]
        %v402 = vld [vmem:[%s225 + $0x338] sm:$0xff]
        %v403 = vld [vmem:[%s225 + $0x340] sm:$0xff]
        %v404 = vld [vmem:[%s225 + $0x348] sm:$0xff]
        %v405 = vld [vmem:[%s225 + $0x350] sm:$0xff]
        %v406 = vld [vmem:[%s225 + $0x358] sm:$0xff]
        %v407 = vld [vmem:[%s225 + $0x360] sm:$0xff]
        %v408 = vld [vmem:[%s225 + $0x368] sm:$0xff]
        %v409 = vld [vmem:[%s225 + $0x370] sm:$0xff]
        %v410 = vld [vmem:[%s225 + $0x378] sm:$0xff]
        %v411 = vld [vmem:[%s225 + $0x380] sm:$0xff]
        %v412 = vld [vmem:[%s225 + $0x388] sm:$0xff]
        %v413 = vld [vmem:[%s225 + $0x390] sm:$0xff]
        %v414 = vld [vmem:[%s225 + $0x398] sm:$0xff]
        %v415 = vld [vmem:[%s225 + $0x3a0] sm:$0xff]
        %v416 = vld [vmem:[%s225 + $0x3a8] sm:$0xff]
        %v417 = vld [vmem:[%s225 + $0x3b0] sm:$0xff]
        %v418 = vld [vmem:[%s225 + $0x3b8] sm:$0xff]
        %v419 = vld [vmem:[%s225 + $0x3c0] sm:$0xff]
        %v420 = vld [vmem:[%s225 + $0x3c8] sm:$0xff]
        %v421 = vld [vmem:[%s225 + $0x3d0] sm:$0xff]
        %v422 = vld [vmem:[%s225 + $0x3d8] sm:$0xff]
        %v423 = vld [vmem:[%s225 + $0x3e0] sm:$0xff]
        %v424 = vld [vmem:[%s225 + $0x3e8] sm:$0xff]
        %v425 = vld [vmem:[%s225 + $0x3f0] sm:$0xff]
        %v426 = vld [vmem:[%s225 + $0x3f8] sm:$0xff]
        %v427 = vld [vmem:[%s234] sm:$0xff]
        %v429 = vlaneseq
        %v430 = vshrl.u32 %v429, 7
        %v431 = vsub.s32 0, %v430
        %v432 = vrot.slane %v427, %v431
        %v433 = vlaneseq
        %v434 = vshrl.u32 %v433, 7
        %v435 = vsub.s32 1, %v434
        %v436 = vrot.slane %v427, %v435
        %v437 = vlaneseq
        %v438 = vshrl.u32 %v437, 7
        %v439 = vsub.s32 2, %v438
        %v440 = vrot.slane %v427, %v439
        %v441 = vlaneseq
        %v442 = vshrl.u32 %v441, 7
        %v443 = vsub.s32 3, %v442
        %v444 = vrot.slane %v427, %v443
        %v445 = vlaneseq
        %v446 = vshrl.u32 %v445, 7
        %v447 = vsub.s32 4, %v446
        %v448 = vrot.slane %v427, %v447
        %v449 = vlaneseq
        %v450 = vshrl.u32 %v449, 7
        %v451 = vsub.s32 5, %v450
        %v452 = vrot.slane %v427, %v451
        %v453 = vlaneseq
        %v454 = vshrl.u32 %v453, 7
        %v455 = vsub.s32 6, %v454
        %v456 = vrot.slane %v427, %v455
        %v457 = vlaneseq
        %v458 = vshrl.u32 %v457, 7
        %v459 = vsub.s32 7, %v458
        %v460 = vrot.slane %v427, %v459
        %v501 = vunpack.c.l.b16 %v267
        %v502 = vunpack.c.h.b16 %v267
        %v503 = vunpack.c.l.b16 %v268
        %v504 = vunpack.c.h.b16 %v268
        %v505 = vunpack.c.l.b16 %v269
        %v506 = vunpack.c.h.b16 %v269
        %v507 = vunpack.c.l.b16 %v270
        %v508 = vunpack.c.h.b16 %v270
        %v509 = vunpack.c.l.b16 %v271
        %v510 = vunpack.c.h.b16 %v271
        %v511 = vunpack.c.l.b16 %v272
        %v512 = vunpack.c.h.b16 %v272
        %v513 = vunpack.c.l.b16 %v273
        %v514 = vunpack.c.h.b16 %v273
        %v515 = vunpack.c.l.b16 %v274
        %v516 = vunpack.c.h.b16 %v274
        %v517 = vunpack.c.l.b16 %v275
        %v518 = vunpack.c.h.b16 %v275
        %v519 = vunpack.c.l.b16 %v276
        %v520 = vunpack.c.h.b16 %v276
        %v521 = vunpack.c.l.b16 %v277
        %v522 = vunpack.c.h.b16 %v277
        %v523 = vunpack.c.l.b16 %v278
        %v524 = vunpack.c.h.b16 %v278
        %v525 = vunpack.c.l.b16 %v279
        %v526 = vunpack.c.h.b16 %v279
        %v527 = vunpack.c.l.b16 %v280
        %v528 = vunpack.c.h.b16 %v280
        %v529 = vunpack.c.l.b16 %v281
        %v530 = vunpack.c.h.b16 %v281
        %v531 = vunpack.c.l.b16 %v282
        %v532 = vunpack.c.h.b16 %v282
        %v533 = vunpack.c.l.b16 %v283
        %v534 = vunpack.c.h.b16 %v283
        %v535 = vunpack.c.l.b16 %v284
        %v536 = vunpack.c.h.b16 %v284
        %v537 = vunpack.c.l.b16 %v285
        %v538 = vunpack.c.h.b16 %v285
        %v539 = vunpack.c.l.b16 %v286
        %v540 = vunpack.c.h.b16 %v286
        %v541 = vunpack.c.l.b16 %v287
        %v542 = vunpack.c.h.b16 %v287
        %v543 = vunpack.c.l.b16 %v288
        %v544 = vunpack.c.h.b16 %v288
        %v545 = vunpack.c.l.b16 %v289
        %v546 = vunpack.c.h.b16 %v289
        %v547 = vunpack.c.l.b16 %v290
        %v548 = vunpack.c.h.b16 %v290
        %v549 = vunpack.c.l.b16 %v291
        %v550 = vunpack.c.h.b16 %v291
        %v551 = vunpack.c.l.b16 %v292
        %v552 = vunpack.c.h.b16 %v292
        %v553 = vunpack.c.l.b16 %v293
        %v554 = vunpack.c.h.b16 %v293
        %v555 = vunpack.c.l.b16 %v294
        %v556 = vunpack.c.h.b16 %v294
        %v557 = vunpack.c.l.b16 %v295
        %v558 = vunpack.c.h.b16 %v295
        %v559 = vunpack.c.l.b16 %v296
        %v560 = vunpack.c.h.b16 %v296
        %v561 = vunpack.c.l.b16 %v297
        %v562 = vunpack.c.h.b16 %v297
        %v563 = vunpack.c.l.b16 %v298
        %v564 = vunpack.c.h.b16 %v298
        %v565 = vpack.c.b16 %v503, %v501
        %v566 = vpack.c.b16 %v504, %v502
        %v567 = vpack.c.b16 %v507, %v505
        %v568 = vpack.c.b16 %v508, %v506
        %v569 = vpack.c.b16 %v511, %v509
        %v570 = vpack.c.b16 %v512, %v510
        %v571 = vpack.c.b16 %v515, %v513
        %v572 = vpack.c.b16 %v516, %v514
        %v573 = vpack.c.b16 %v519, %v517
        %v574 = vpack.c.b16 %v520, %v518
        %v575 = vpack.c.b16 %v523, %v521
        %v576 = vpack.c.b16 %v524, %v522
        %v577 = vpack.c.b16 %v527, %v525
        %v578 = vpack.c.b16 %v528, %v526
        %v579 = vpack.c.b16 %v531, %v529
        %v580 = vpack.c.b16 %v532, %v530
        %v581 = vpack.c.b16 %v535, %v533
        %v582 = vpack.c.b16 %v536, %v534
        %v583 = vpack.c.b16 %v539, %v537
        %v584 = vpack.c.b16 %v540, %v538
        %v585 = vpack.c.b16 %v543, %v541
        %v586 = vpack.c.b16 %v544, %v542
        %v587 = vpack.c.b16 %v547, %v545
        %v588 = vpack.c.b16 %v548, %v546
        %v589 = vpack.c.b16 %v551, %v549
        %v590 = vpack.c.b16 %v552, %v550
        %v591 = vpack.c.b16 %v555, %v553
        %v592 = vpack.c.b16 %v556, %v554
        %v593 = vpack.c.b16 %v559, %v557
        %v594 = vpack.c.b16 %v560, %v558
        %v595 = vpack.c.b16 %v563, %v561
        %v596 = vpack.c.b16 %v564, %v562
        %v757 = vunpack.c.l.b16 %v299
        %v758 = vunpack.c.h.b16 %v299
        %v759 = vunpack.c.l.b16 %v300
        %v760 = vunpack.c.h.b16 %v300
        %v761 = vunpack.c.l.b16 %v301
        %v762 = vunpack.c.h.b16 %v301
        %v763 = vunpack.c.l.b16 %v302
        %v764 = vunpack.c.h.b16 %v302
        %v765 = vunpack.c.l.b16 %v303
        %v766 = vunpack.c.h.b16 %v303
        %v767 = vunpack.c.l.b16 %v304
        %v768 = vunpack.c.h.b16 %v304
        %v769 = vunpack.c.l.b16 %v305
        %v770 = vunpack.c.h.b16 %v305
        %v771 = vunpack.c.l.b16 %v306
        %v772 = vunpack.c.h.b16 %v306
        %v773 = vunpack.c.l.b16 %v307
        %v774 = vunpack.c.h.b16 %v307
        %v775 = vunpack.c.l.b16 %v308
        %v776 = vunpack.c.h.b16 %v308
        %v777 = vunpack.c.l.b16 %v309
        %v778 = vunpack.c.h.b16 %v309
        %v779 = vunpack.c.l.b16 %v310
        %v780 = vunpack.c.h.b16 %v310
        %v781 = vunpack.c.l.b16 %v311
        %v782 = vunpack.c.h.b16 %v311
        %v783 = vunpack.c.l.b16 %v312
        %v784 = vunpack.c.h.b16 %v312
        %v785 = vunpack.c.l.b16 %v313
        %v786 = vunpack.c.h.b16 %v313
        %v787 = vunpack.c.l.b16 %v314
        %v788 = vunpack.c.h.b16 %v314
        %v789 = vunpack.c.l.b16 %v315
        %v790 = vunpack.c.h.b16 %v315
        %v791 = vunpack.c.l.b16 %v316
        %v792 = vunpack.c.h.b16 %v316
        %v793 = vunpack.c.l.b16 %v317
        %v794 = vunpack.c.h.b16 %v317
        %v795 = vunpack.c.l.b16 %v318
        %v796 = vunpack.c.h.b16 %v318
        %v797 = vunpack.c.l.b16 %v319
        %v798 = vunpack.c.h.b16 %v319
        %v799 = vunpack.c.l.b16 %v320
        %v800 = vunpack.c.h.b16 %v320
        %v801 = vunpack.c.l.b16 %v321
        %v802 = vunpack.c.h.b16 %v321
        %v803 = vunpack.c.l.b16 %v322
        %v804 = vunpack.c.h.b16 %v322
        %v805 = vunpack.c.l.b16 %v323
        %v806 = vunpack.c.h.b16 %v323
        %v807 = vunpack.c.l.b16 %v324
        %v808 = vunpack.c.h.b16 %v324
        %v809 = vunpack.c.l.b16 %v325
        %v810 = vunpack.c.h.b16 %v325
        %v811 = vunpack.c.l.b16 %v326
        %v812 = vunpack.c.h.b16 %v326
        %v813 = vunpack.c.l.b16 %v327
        %v814 = vunpack.c.h.b16 %v327
        %v815 = vunpack.c.l.b16 %v328
        %v816 = vunpack.c.h.b16 %v328
        %v817 = vunpack.c.l.b16 %v329
        %v818 = vunpack.c.h.b16 %v329
        %v819 = vunpack.c.l.b16 %v330
        %v820 = vunpack.c.h.b16 %v330
        %v821 = vunpack.c.l.b16 %v331
        %v822 = vunpack.c.h.b16 %v331
        %v823 = vunpack.c.l.b16 %v332
        %v824 = vunpack.c.h.b16 %v332
        %v825 = vunpack.c.l.b16 %v333
        %v826 = vunpack.c.h.b16 %v333
        %v827 = vunpack.c.l.b16 %v334
        %v828 = vunpack.c.h.b16 %v334
        %v829 = vunpack.c.l.b16 %v335
        %v830 = vunpack.c.h.b16 %v335
        %v831 = vunpack.c.l.b16 %v336
        %v832 = vunpack.c.h.b16 %v336
        %v833 = vunpack.c.l.b16 %v337
        %v834 = vunpack.c.h.b16 %v337
        %v835 = vunpack.c.l.b16 %v338
        %v836 = vunpack.c.h.b16 %v338
        %v837 = vunpack.c.l.b16 %v339
        %v838 = vunpack.c.h.b16 %v339
        %v839 = vunpack.c.l.b16 %v340
        %v840 = vunpack.c.h.b16 %v340
        %v841 = vunpack.c.l.b16 %v341
        %v842 = vunpack.c.h.b16 %v341
        %v843 = vunpack.c.l.b16 %v342
        %v844 = vunpack.c.h.b16 %v342
        %v845 = vunpack.c.l.b16 %v343
        %v846 = vunpack.c.h.b16 %v343
        %v847 = vunpack.c.l.b16 %v344
        %v848 = vunpack.c.h.b16 %v344
        %v849 = vunpack.c.l.b16 %v345
        %v850 = vunpack.c.h.b16 %v345
        %v851 = vunpack.c.l.b16 %v346
        %v852 = vunpack.c.h.b16 %v346
        %v853 = vunpack.c.l.b16 %v347
        %v854 = vunpack.c.h.b16 %v347
        %v855 = vunpack.c.l.b16 %v348
        %v856 = vunpack.c.h.b16 %v348
        %v857 = vunpack.c.l.b16 %v349
        %v858 = vunpack.c.h.b16 %v349
        %v859 = vunpack.c.l.b16 %v350
        %v860 = vunpack.c.h.b16 %v350
        %v861 = vunpack.c.l.b16 %v351
        %v862 = vunpack.c.h.b16 %v351
        %v863 = vunpack.c.l.b16 %v352
        %v864 = vunpack.c.h.b16 %v352
        %v865 = vunpack.c.l.b16 %v353
        %v866 = vunpack.c.h.b16 %v353
        %v867 = vunpack.c.l.b16 %v354
        %v868 = vunpack.c.h.b16 %v354
        %v869 = vunpack.c.l.b16 %v355
        %v870 = vunpack.c.h.b16 %v355
        %v871 = vunpack.c.l.b16 %v356
        %v872 = vunpack.c.h.b16 %v356
        %v873 = vunpack.c.l.b16 %v357
        %v874 = vunpack.c.h.b16 %v357
        %v875 = vunpack.c.l.b16 %v358
        %v876 = vunpack.c.h.b16 %v358
        %v877 = vunpack.c.l.b16 %v359
        %v878 = vunpack.c.h.b16 %v359
        %v879 = vunpack.c.l.b16 %v360
        %v880 = vunpack.c.h.b16 %v360
        %v881 = vunpack.c.l.b16 %v361
        %v882 = vunpack.c.h.b16 %v361
        %v883 = vunpack.c.l.b16 %v362
        %v884 = vunpack.c.h.b16 %v362
        %v885 = vunpack.c.l.b16 %v363
        %v886 = vunpack.c.h.b16 %v363
        %v887 = vunpack.c.l.b16 %v364
        %v888 = vunpack.c.h.b16 %v364
        %v889 = vunpack.c.l.b16 %v365
        %v890 = vunpack.c.h.b16 %v365
        %v891 = vunpack.c.l.b16 %v366
        %v892 = vunpack.c.h.b16 %v366
        %v893 = vunpack.c.l.b16 %v367
        %v894 = vunpack.c.h.b16 %v367
        %v895 = vunpack.c.l.b16 %v368
        %v896 = vunpack.c.h.b16 %v368
        %v897 = vunpack.c.l.b16 %v369
        %v898 = vunpack.c.h.b16 %v369
        %v899 = vunpack.c.l.b16 %v370
        %v900 = vunpack.c.h.b16 %v370
        %v901 = vunpack.c.l.b16 %v371
        %v902 = vunpack.c.h.b16 %v371
        %v903 = vunpack.c.l.b16 %v372
        %v904 = vunpack.c.h.b16 %v372
        %v905 = vunpack.c.l.b16 %v373
        %v906 = vunpack.c.h.b16 %v373
        %v907 = vunpack.c.l.b16 %v374
        %v908 = vunpack.c.h.b16 %v374
        %v909 = vunpack.c.l.b16 %v375
        %v910 = vunpack.c.h.b16 %v375
        %v911 = vunpack.c.l.b16 %v376
        %v912 = vunpack.c.h.b16 %v376
        %v913 = vunpack.c.l.b16 %v377
        %v914 = vunpack.c.h.b16 %v377
        %v915 = vunpack.c.l.b16 %v378
        %v916 = vunpack.c.h.b16 %v378
        %v917 = vunpack.c.l.b16 %v379
        %v918 = vunpack.c.h.b16 %v379
        %v919 = vunpack.c.l.b16 %v380
        %v920 = vunpack.c.h.b16 %v380
        %v921 = vunpack.c.l.b16 %v381
        %v922 = vunpack.c.h.b16 %v381
        %v923 = vunpack.c.l.b16 %v382
        %v924 = vunpack.c.h.b16 %v382
        %v925 = vunpack.c.l.b16 %v383
        %v926 = vunpack.c.h.b16 %v383
        %v927 = vunpack.c.l.b16 %v384
        %v928 = vunpack.c.h.b16 %v384
        %v929 = vunpack.c.l.b16 %v385
        %v930 = vunpack.c.h.b16 %v385
        %v931 = vunpack.c.l.b16 %v386
        %v932 = vunpack.c.h.b16 %v386
        %v933 = vunpack.c.l.b16 %v387
        %v934 = vunpack.c.h.b16 %v387
        %v935 = vunpack.c.l.b16 %v388
        %v936 = vunpack.c.h.b16 %v388
        %v937 = vunpack.c.l.b16 %v389
        %v938 = vunpack.c.h.b16 %v389
        %v939 = vunpack.c.l.b16 %v390
        %v940 = vunpack.c.h.b16 %v390
        %v941 = vunpack.c.l.b16 %v391
        %v942 = vunpack.c.h.b16 %v391
        %v943 = vunpack.c.l.b16 %v392
        %v944 = vunpack.c.h.b16 %v392
        %v945 = vunpack.c.l.b16 %v393
        %v946 = vunpack.c.h.b16 %v393
        %v947 = vunpack.c.l.b16 %v394
        %v948 = vunpack.c.h.b16 %v394
        %v949 = vunpack.c.l.b16 %v395
        %v950 = vunpack.c.h.b16 %v395
        %v951 = vunpack.c.l.b16 %v396
        %v952 = vunpack.c.h.b16 %v396
        %v953 = vunpack.c.l.b16 %v397
        %v954 = vunpack.c.h.b16 %v397
        %v955 = vunpack.c.l.b16 %v398
        %v956 = vunpack.c.h.b16 %v398
        %v957 = vunpack.c.l.b16 %v399
        %v958 = vunpack.c.h.b16 %v399
        %v959 = vunpack.c.l.b16 %v400
        %v960 = vunpack.c.h.b16 %v400
        %v961 = vunpack.c.l.b16 %v401
        %v962 = vunpack.c.h.b16 %v401
        %v963 = vunpack.c.l.b16 %v402
        %v964 = vunpack.c.h.b16 %v402
        %v965 = vunpack.c.l.b16 %v403
        %v966 = vunpack.c.h.b16 %v403
        %v967 = vunpack.c.l.b16 %v404
        %v968 = vunpack.c.h.b16 %v404
        %v969 = vunpack.c.l.b16 %v405
        %v970 = vunpack.c.h.b16 %v405
        %v971 = vunpack.c.l.b16 %v406
        %v972 = vunpack.c.h.b16 %v406
        %v973 = vunpack.c.l.b16 %v407
        %v974 = vunpack.c.h.b16 %v407
        %v975 = vunpack.c.l.b16 %v408
        %v976 = vunpack.c.h.b16 %v408
        %v977 = vunpack.c.l.b16 %v409
        %v978 = vunpack.c.h.b16 %v409
        %v979 = vunpack.c.l.b16 %v410
        %v980 = vunpack.c.h.b16 %v410
        %v981 = vunpack.c.l.b16 %v411
        %v982 = vunpack.c.h.b16 %v411
        %v983 = vunpack.c.l.b16 %v412
        %v984 = vunpack.c.h.b16 %v412
        %v985 = vunpack.c.l.b16 %v413
        %v986 = vunpack.c.h.b16 %v413
        %v987 = vunpack.c.l.b16 %v414
        %v988 = vunpack.c.h.b16 %v414
        %v989 = vunpack.c.l.b16 %v415
        %v990 = vunpack.c.h.b16 %v415
        %v991 = vunpack.c.l.b16 %v416
        %v992 = vunpack.c.h.b16 %v416
        %v993 = vunpack.c.l.b16 %v417
        %v994 = vunpack.c.h.b16 %v417
        %v995 = vunpack.c.l.b16 %v418
        %v996 = vunpack.c.h.b16 %v418
        %v997 = vunpack.c.l.b16 %v419
        %v998 = vunpack.c.h.b16 %v419
        %v999 = vunpack.c.l.b16 %v420
        %v1000 = vunpack.c.h.b16 %v420
        %v1001 = vunpack.c.l.b16 %v421
        %v1002 = vunpack.c.h.b16 %v421
        %v1003 = vunpack.c.l.b16 %v422
        %v1004 = vunpack.c.h.b16 %v422
        %v1005 = vunpack.c.l.b16 %v423
        %v1006 = vunpack.c.h.b16 %v423
        %v1007 = vunpack.c.l.b16 %v424
        %v1008 = vunpack.c.h.b16 %v424
        %v1009 = vunpack.c.l.b16 %v425
        %v1010 = vunpack.c.h.b16 %v425
        %v1011 = vunpack.c.l.b16 %v426
        %v1012 = vunpack.c.h.b16 %v426
        %v1013 = vpack.c.b16 %v765, %v757
        %v1014 = vpack.c.b16 %v766, %v758
        %v1015 = vpack.c.b16 %v767, %v759
        %v1016 = vpack.c.b16 %v768, %v760
        %v1017 = vpack.c.b16 %v769, %v761
        %v1018 = vpack.c.b16 %v770, %v762
        %v1019 = vpack.c.b16 %v771, %v763
        %v1020 = vpack.c.b16 %v772, %v764
        %v1021 = vpack.c.b16 %v781, %v773
        %v1022 = vpack.c.b16 %v782, %v774
        %v1023 = vpack.c.b16 %v783, %v775
        %v1024 = vpack.c.b16 %v784, %v776
        %v1025 = vpack.c.b16 %v785, %v777
        %v1026 = vpack.c.b16 %v786, %v778
        %v1027 = vpack.c.b16 %v787, %v779
        %v1028 = vpack.c.b16 %v788, %v780
        %v1029 = vpack.c.b16 %v797, %v789
        %v1030 = vpack.c.b16 %v798, %v790
        %v1031 = vpack.c.b16 %v799, %v791
        %v1032 = vpack.c.b16 %v800, %v792
        %v1033 = vpack.c.b16 %v801, %v793
        %v1034 = vpack.c.b16 %v802, %v794
        %v1035 = vpack.c.b16 %v803, %v795
        %v1036 = vpack.c.b16 %v804, %v796
        %v1037 = vpack.c.b16 %v813, %v805
        %v1038 = vpack.c.b16 %v814, %v806
        %v1039 = vpack.c.b16 %v815, %v807
        %v1040 = vpack.c.b16 %v816, %v808
        %v1041 = vpack.c.b16 %v817, %v809
        %v1042 = vpack.c.b16 %v818, %v810
        %v1043 = vpack.c.b16 %v819, %v811
        %v1044 = vpack.c.b16 %v820, %v812
        %v1045 = vpack.c.b16 %v829, %v821
        %v1046 = vpack.c.b16 %v830, %v822
        %v1047 = vpack.c.b16 %v831, %v823
        %v1048 = vpack.c.b16 %v832, %v824
        %v1049 = vpack.c.b16 %v833, %v825
        %v1050 = vpack.c.b16 %v834, %v826
        %v1051 = vpack.c.b16 %v835, %v827
        %v1052 = vpack.c.b16 %v836, %v828
        %v1053 = vpack.c.b16 %v845, %v837
        %v1054 = vpack.c.b16 %v846, %v838
        %v1055 = vpack.c.b16 %v847, %v839
        %v1056 = vpack.c.b16 %v848, %v840
        %v1057 = vpack.c.b16 %v849, %v841
        %v1058 = vpack.c.b16 %v850, %v842
        %v1059 = vpack.c.b16 %v851, %v843
        %v1060 = vpack.c.b16 %v852, %v844
        %v1061 = vpack.c.b16 %v861, %v853
        %v1062 = vpack.c.b16 %v862, %v854
        %v1063 = vpack.c.b16 %v863, %v855
        %v1064 = vpack.c.b16 %v864, %v856
        %v1065 = vpack.c.b16 %v865, %v857
        %v1066 = vpack.c.b16 %v866, %v858
        %v1067 = vpack.c.b16 %v867, %v859
        %v1068 = vpack.c.b16 %v868, %v860
        %v1069 = vpack.c.b16 %v877, %v869
        %v1070 = vpack.c.b16 %v878, %v870
        %v1071 = vpack.c.b16 %v879, %v871
        %v1072 = vpack.c.b16 %v880, %v872
        %v1073 = vpack.c.b16 %v881, %v873
        %v1074 = vpack.c.b16 %v882, %v874
        %v1075 = vpack.c.b16 %v883, %v875
        %v1076 = vpack.c.b16 %v884, %v876
        %v1077 = vpack.c.b16 %v893, %v885
        %v1078 = vpack.c.b16 %v894, %v886
        %v1079 = vpack.c.b16 %v895, %v887
        %v1080 = vpack.c.b16 %v896, %v888
        %v1081 = vpack.c.b16 %v897, %v889
        %v1082 = vpack.c.b16 %v898, %v890
        %v1083 = vpack.c.b16 %v899, %v891
        %v1084 = vpack.c.b16 %v900, %v892
        %v1085 = vpack.c.b16 %v909, %v901
        %v1086 = vpack.c.b16 %v910, %v902
        %v1087 = vpack.c.b16 %v911, %v903
        %v1088 = vpack.c.b16 %v912, %v904
        %v1089 = vpack.c.b16 %v913, %v905
        %v1090 = vpack.c.b16 %v914, %v906
        %v1091 = vpack.c.b16 %v915, %v907
        %v1092 = vpack.c.b16 %v916, %v908
        %v1093 = vpack.c.b16 %v925, %v917
        %v1094 = vpack.c.b16 %v926, %v918
        %v1095 = vpack.c.b16 %v927, %v919
        %v1096 = vpack.c.b16 %v928, %v920
        %v1097 = vpack.c.b16 %v929, %v921
        %v1098 = vpack.c.b16 %v930, %v922
        %v1099 = vpack.c.b16 %v931, %v923
        %v1100 = vpack.c.b16 %v932, %v924
        %v1101 = vpack.c.b16 %v941, %v933
        %v1102 = vpack.c.b16 %v942, %v934
        %v1103 = vpack.c.b16 %v943, %v935
        %v1104 = vpack.c.b16 %v944, %v936
        %v1105 = vpack.c.b16 %v945, %v937
        %v1106 = vpack.c.b16 %v946, %v938
        %v1107 = vpack.c.b16 %v947, %v939
        %v1108 = vpack.c.b16 %v948, %v940
        %v1109 = vpack.c.b16 %v957, %v949
        %v1110 = vpack.c.b16 %v958, %v950
        %v1111 = vpack.c.b16 %v959, %v951
        %v1112 = vpack.c.b16 %v960, %v952
        %v1113 = vpack.c.b16 %v961, %v953
        %v1114 = vpack.c.b16 %v962, %v954
        %v1115 = vpack.c.b16 %v963, %v955
        %v1116 = vpack.c.b16 %v964, %v956
        %v1117 = vpack.c.b16 %v973, %v965
        %v1118 = vpack.c.b16 %v974, %v966
        %v1119 = vpack.c.b16 %v975, %v967
        %v1120 = vpack.c.b16 %v976, %v968
        %v1121 = vpack.c.b16 %v977, %v969
        %v1122 = vpack.c.b16 %v978, %v970
        %v1123 = vpack.c.b16 %v979, %v971
        %v1124 = vpack.c.b16 %v980, %v972
        %v1125 = vpack.c.b16 %v989, %v981
        %v1126 = vpack.c.b16 %v990, %v982
        %v1127 = vpack.c.b16 %v991, %v983
        %v1128 = vpack.c.b16 %v992, %v984
        %v1129 = vpack.c.b16 %v993, %v985
        %v1130 = vpack.c.b16 %v994, %v986
        %v1131 = vpack.c.b16 %v995, %v987
        %v1132 = vpack.c.b16 %v996, %v988
        %v1133 = vpack.c.b16 %v1005, %v997
        %v1134 = vpack.c.b16 %v1006, %v998
        %v1135 = vpack.c.b16 %v1007, %v999
        %v1136 = vpack.c.b16 %v1008, %v1000
        %v1137 = vpack.c.b16 %v1009, %v1001
        %v1138 = vpack.c.b16 %v1010, %v1002
        %v1139 = vpack.c.b16 %v1011, %v1003
        %v1140 = vpack.c.b16 %v1012, %v1004
        %1269 = vmatprep.subr.bf16.mxu0 %v1070
        %1270 = vmatpush1.bf16.msra.mxu0 %v1069
        %1271 = vmatprep.subr.bf16.mxu0 %v1062
        %1272 = vmatpush1.bf16.msra.mxu0 %v1061
        %1273 = vmatprep.subr.bf16.mxu0 %v1054
        %1274 = vmatpush1.bf16.msra.mxu0 %v1053
        %1275 = vmatprep.subr.bf16.mxu0 %v1046
        %1276 = vmatpush1.bf16.msra.mxu0 %v1045
        %1277 = vmatprep.subr.bf16.mxu0 %v1038
        %1278 = vmatpush1.bf16.msra.mxu0 %v1037
        %1279 = vmatprep.subr.bf16.mxu0 %v1030
        %1280 = vmatpush1.bf16.msra.mxu0 %v1029
        %1281 = vmatprep.subr.bf16.mxu0 %v1022
        %1282 = vmatpush1.bf16.msra.mxu0 %v1021
        %1283 = vmatprep.subr.bf16.mxu0 %v1014
        %1284 = vmatpush1.bf16.msra.mxu0 %v1013
        %1285 = vmatprep.subr.bf16.mxu0 %v1134
        %1286 = vmatpush2.bf16.msra.mxu0 %v1133
        %1287 = vmatprep.subr.bf16.mxu0 %v1126
        %1288 = vmatpush2.bf16.msra.mxu0 %v1125
        %1289 = vmatprep.subr.bf16.mxu0 %v1118
        %1290 = vmatpush2.bf16.msra.mxu0 %v1117
        %1291 = vmatprep.subr.bf16.mxu0 %v1110
        %1292 = vmatpush2.bf16.msra.mxu0 %v1109
        %1293 = vmatprep.subr.bf16.mxu0 %v1102
        %1294 = vmatpush2.bf16.msra.mxu0 %v1101
        %1295 = vmatprep.subr.bf16.mxu0 %v1094
        %1296 = vmatpush2.bf16.msra.mxu0 %v1093
        %1297 = vmatprep.subr.bf16.mxu0 %v1086
        %1298 = vmatpush2.bf16.msra.mxu0 %v1085
        %1299 = vmatprep.subr.bf16.mxu0 %v1078
        %1300 = vmatpush2.bf16.msra.mxu0 %v1077
        %1301 = vmatprep.mubr.bf16.mxu0 %v566
        %1302 = vmatmul.mubr.bf16.gmra.mxu0 %v565
        %v1303 = vpop.f32.mrf.mxu0
        %v1304 = vadd.f32 %v432, %v1303
        %v1305 = vpop.f32.mrf.mxu0
        %v1306 = vadd.f32 %v436, %v1305
        %v1307 = vpop.f32.mrf.mxu0
        %v1308 = vadd.f32 %v432, %v1307
        %v1309 = vpop.f32.mrf.mxu0
        %v1310 = vadd.f32 %v436, %v1309
        %1311 = vmatprep.mubr.bf16.mxu0 %v568
        %1312 = vmatmul.mubr.bf16.gmra.mxu0 %v567
        %v1313 = vpop.f32.mrf.mxu0
        %v1314 = vadd.f32 %v432, %v1313
        %v1315 = vpop.f32.mrf.mxu0
        %v1316 = vadd.f32 %v436, %v1315
        %v1317 = vpop.f32.mrf.mxu0
        %v1318 = vadd.f32 %v432, %v1317
        %v1319 = vpop.f32.mrf.mxu0
        %v1320 = vadd.f32 %v436, %v1319
        %1321 = vmatprep.mubr.bf16.mxu0 %v570
        %1322 = vmatmul.mubr.bf16.gmra.mxu0 %v569
        %v1323 = vpop.f32.mrf.mxu0
        %v1324 = vadd.f32 %v432, %v1323
        %v1325 = vpop.f32.mrf.mxu0
        %v1326 = vadd.f32 %v436, %v1325
        %v1327 = vpop.f32.mrf.mxu0
        %v1328 = vadd.f32 %v432, %v1327
        %v1329 = vpop.f32.mrf.mxu0
        %v1330 = vadd.f32 %v436, %v1329
        %1331 = vmatprep.mubr.bf16.mxu0 %v572
        %1332 = vmatmul.mubr.bf16.gmra.mxu0 %v571
        %v1333 = vpop.f32.mrf.mxu0
        %v1334 = vadd.f32 %v432, %v1333
        %v1335 = vpop.f32.mrf.mxu0
        %v1336 = vadd.f32 %v436, %v1335
        %v1337 = vpop.f32.mrf.mxu0
        %v1338 = vadd.f32 %v432, %v1337
        %v1339 = vpop.f32.mrf.mxu0
        %v1340 = vadd.f32 %v436, %v1339
        %1341 = vmatprep.mubr.bf16.mxu0 %v574
        %1342 = vmatmul.mubr.bf16.gmra.mxu0 %v573
        %v1343 = vpop.f32.mrf.mxu0
        %v1344 = vadd.f32 %v432, %v1343
        %v1345 = vpop.f32.mrf.mxu0
        %v1346 = vadd.f32 %v436, %v1345
        %v1347 = vpop.f32.mrf.mxu0
        %v1348 = vadd.f32 %v432, %v1347
        %v1349 = vpop.f32.mrf.mxu0
        %v1350 = vadd.f32 %v436, %v1349
        %1351 = vmatprep.mubr.bf16.mxu0 %v576
        %1352 = vmatmul.mubr.bf16.gmra.mxu0 %v575
        %v1353 = vpop.f32.mrf.mxu0
        %v1354 = vadd.f32 %v432, %v1353
        %v1355 = vpop.f32.mrf.mxu0
        %v1356 = vadd.f32 %v436, %v1355
        %v1357 = vpop.f32.mrf.mxu0
        %v1358 = vadd.f32 %v432, %v1357
        %v1359 = vpop.f32.mrf.mxu0
        %v1360 = vadd.f32 %v436, %v1359
        %1361 = vmatprep.mubr.bf16.mxu0 %v578
        %1362 = vmatmul.mubr.bf16.gmra.mxu0 %v577
        %v1363 = vpop.f32.mrf.mxu0
        %v1364 = vadd.f32 %v432, %v1363
        %v1365 = vpop.f32.mrf.mxu0
        %v1366 = vadd.f32 %v436, %v1365
        %v1367 = vpop.f32.mrf.mxu0
        %v1368 = vadd.f32 %v432, %v1367
        %v1369 = vpop.f32.mrf.mxu0
        %v1370 = vadd.f32 %v436, %v1369
        %1371 = vmatprep.mubr.bf16.mxu0 %v580
        %1372 = vmatmul.mubr.bf16.gmra.mxu0 %v579
        %v1373 = vpop.f32.mrf.mxu0
        %v1374 = vadd.f32 %v432, %v1373
        %v1375 = vpop.f32.mrf.mxu0
        %v1376 = vadd.f32 %v436, %v1375
        %v1377 = vpop.f32.mrf.mxu0
        %v1378 = vadd.f32 %v432, %v1377
        %v1379 = vpop.f32.mrf.mxu0
        %v1380 = vadd.f32 %v436, %v1379
        %1381 = vmatprep.mubr.bf16.mxu0 %v582
        %1382 = vmatmul.mubr.bf16.gmra.mxu0 %v581
        %v1383 = vpop.f32.mrf.mxu0
        %v1384 = vadd.f32 %v432, %v1383
        %v1385 = vpop.f32.mrf.mxu0
        %v1386 = vadd.f32 %v436, %v1385
        %v1387 = vpop.f32.mrf.mxu0
        %v1388 = vadd.f32 %v432, %v1387
        %v1389 = vpop.f32.mrf.mxu0
        %v1390 = vadd.f32 %v436, %v1389
        %1391 = vmatprep.mubr.bf16.mxu0 %v584
        %1392 = vmatmul.mubr.bf16.gmra.mxu0 %v583
        %v1393 = vpop.f32.mrf.mxu0
        %v1394 = vadd.f32 %v432, %v1393
        %v1395 = vpop.f32.mrf.mxu0
        %v1396 = vadd.f32 %v436, %v1395
        %v1397 = vpop.f32.mrf.mxu0
        %v1398 = vadd.f32 %v432, %v1397
        %v1399 = vpop.f32.mrf.mxu0
        %v1400 = vadd.f32 %v436, %v1399
        %1401 = vmatprep.mubr.bf16.mxu0 %v586
        %1402 = vmatmul.mubr.bf16.gmra.mxu0 %v585
        %v1403 = vpop.f32.mrf.mxu0
        %v1404 = vadd.f32 %v432, %v1403
        %v1405 = vpop.f32.mrf.mxu0
        %v1406 = vadd.f32 %v436, %v1405
        %v1407 = vpop.f32.mrf.mxu0
        %v1408 = vadd.f32 %v432, %v1407
        %v1409 = vpop.f32.mrf.mxu0
        %v1410 = vadd.f32 %v436, %v1409
        %1411 = vmatprep.mubr.bf16.mxu0 %v588
        %1412 = vmatmul.mubr.bf16.gmra.mxu0 %v587
        %v1413 = vpop.f32.mrf.mxu0
        %v1414 = vadd.f32 %v432, %v1413
        %v1415 = vpop.f32.mrf.mxu0
        %v1416 = vadd.f32 %v436, %v1415
        %v1417 = vpop.f32.mrf.mxu0
        %v1418 = vadd.f32 %v432, %v1417
        %v1419 = vpop.f32.mrf.mxu0
        %v1420 = vadd.f32 %v436, %v1419
        %1421 = vmatprep.mubr.bf16.mxu0 %v590
        %1422 = vmatmul.mubr.bf16.gmra.mxu0 %v589
        %v1423 = vpop.f32.mrf.mxu0
        %v1424 = vadd.f32 %v432, %v1423
        %v1425 = vpop.f32.mrf.mxu0
        %v1426 = vadd.f32 %v436, %v1425
        %v1427 = vpop.f32.mrf.mxu0
        %v1428 = vadd.f32 %v432, %v1427
        %v1429 = vpop.f32.mrf.mxu0
        %v1430 = vadd.f32 %v436, %v1429
        %1431 = vmatprep.mubr.bf16.mxu0 %v592
        %1432 = vmatmul.mubr.bf16.gmra.mxu0 %v591
        %v1433 = vpop.f32.mrf.mxu0
        %v1434 = vadd.f32 %v432, %v1433
        %v1435 = vpop.f32.mrf.mxu0
        %v1436 = vadd.f32 %v436, %v1435
        %v1437 = vpop.f32.mrf.mxu0
        %v1438 = vadd.f32 %v432, %v1437
        %v1439 = vpop.f32.mrf.mxu0
        %v1440 = vadd.f32 %v436, %v1439
        %1441 = vmatprep.mubr.bf16.mxu0 %v594
        %1442 = vmatmul.mubr.bf16.gmra.mxu0 %v593
        %v1443 = vpop.f32.mrf.mxu0
        %v1444 = vadd.f32 %v432, %v1443
        %v1445 = vpop.f32.mrf.mxu0
        %v1446 = vadd.f32 %v436, %v1445
        %v1447 = vpop.f32.mrf.mxu0
        %v1448 = vadd.f32 %v432, %v1447
        %v1449 = vpop.f32.mrf.mxu0
        %v1450 = vadd.f32 %v436, %v1449
        %1451 = vmatprep.mubr.bf16.mxu0 %v596
        %1452 = vmatmul.mubr.bf16.gmra.mxu0 %v595
        %v1453 = vpop.f32.mrf.mxu0
        %v1454 = vadd.f32 %v432, %v1453
        %v1455 = vpop.f32.mrf.mxu0
        %v1456 = vadd.f32 %v436, %v1455
        %v1457 = vpop.f32.mrf.mxu0
        %v1458 = vadd.f32 %v432, %v1457
        %v1459 = vpop.f32.mrf.mxu0
        %v1460 = vadd.f32 %v436, %v1459
        %1461 = vdwg.mxu0
        %1462 = vmatprep.subr.bf16.mxu0 %v1072
        %1463 = vmatpush1.bf16.msra.mxu0 %v1071
        %1464 = vmatprep.subr.bf16.mxu0 %v1064
        %1465 = vmatpush1.bf16.msra.mxu0 %v1063
        %1466 = vmatprep.subr.bf16.mxu0 %v1056
        %1467 = vmatpush1.bf16.msra.mxu0 %v1055
        %1468 = vmatprep.subr.bf16.mxu0 %v1048
        %1469 = vmatpush1.bf16.msra.mxu0 %v1047
        %1470 = vmatprep.subr.bf16.mxu0 %v1040
        %1471 = vmatpush1.bf16.msra.mxu0 %v1039
        %1472 = vmatprep.subr.bf16.mxu0 %v1032
        %1473 = vmatpush1.bf16.msra.mxu0 %v1031
        %1474 = vmatprep.subr.bf16.mxu0 %v1024
        %1475 = vmatpush1.bf16.msra.mxu0 %v1023
        %1476 = vmatprep.subr.bf16.mxu0 %v1016
        %1477 = vmatpush1.bf16.msra.mxu0 %v1015
        %1478 = vmatprep.subr.bf16.mxu0 %v1136
        %1479 = vmatpush2.bf16.msra.mxu0 %v1135
        %1480 = vmatprep.subr.bf16.mxu0 %v1128
        %1481 = vmatpush2.bf16.msra.mxu0 %v1127
        %1482 = vmatprep.subr.bf16.mxu0 %v1120
        %1483 = vmatpush2.bf16.msra.mxu0 %v1119
        %1484 = vmatprep.subr.bf16.mxu0 %v1112
        %1485 = vmatpush2.bf16.msra.mxu0 %v1111
        %1486 = vmatprep.subr.bf16.mxu0 %v1104
        %1487 = vmatpush2.bf16.msra.mxu0 %v1103
        %1488 = vmatprep.subr.bf16.mxu0 %v1096
        %1489 = vmatpush2.bf16.msra.mxu0 %v1095
        %1490 = vmatprep.subr.bf16.mxu0 %v1088
        %1491 = vmatpush2.bf16.msra.mxu0 %v1087
        %1492 = vmatprep.subr.bf16.mxu0 %v1080
        %1493 = vmatpush2.bf16.msra.mxu0 %v1079
        %1494 = vmatprep.mubr.bf16.mxu0 %v566
        %1495 = vmatmul.mubr.bf16.gmra.mxu0 %v565
        %v1496 = vpop.f32.mrf.mxu0
        %v1497 = vadd.f32 %v440, %v1496
        %v1498 = vpop.f32.mrf.mxu0
        %v1499 = vadd.f32 %v444, %v1498
        %v1500 = vpop.f32.mrf.mxu0
        %v1501 = vadd.f32 %v440, %v1500
        %v1502 = vpop.f32.mrf.mxu0
        %v1503 = vadd.f32 %v444, %v1502
        %1504 = vmatprep.mubr.bf16.mxu0 %v568
        %1505 = vmatmul.mubr.bf16.gmra.mxu0 %v567
        %v1506 = vpop.f32.mrf.mxu0
        %v1507 = vadd.f32 %v440, %v1506
        %v1508 = vpop.f32.mrf.mxu0
        %v1509 = vadd.f32 %v444, %v1508
        %v1510 = vpop.f32.mrf.mxu0
        %v1511 = vadd.f32 %v440, %v1510
        %v1512 = vpop.f32.mrf.mxu0
        %v1513 = vadd.f32 %v444, %v1512
        %1514 = vmatprep.mubr.bf16.mxu0 %v570
        %1515 = vmatmul.mubr.bf16.gmra.mxu0 %v569
        %v1516 = vpop.f32.mrf.mxu0
        %v1517 = vadd.f32 %v440, %v1516
        %v1518 = vpop.f32.mrf.mxu0
        %v1519 = vadd.f32 %v444, %v1518
        %v1520 = vpop.f32.mrf.mxu0
        %v1521 = vadd.f32 %v440, %v1520
        %v1522 = vpop.f32.mrf.mxu0
        %v1523 = vadd.f32 %v444, %v1522
        %1524 = vmatprep.mubr.bf16.mxu0 %v572
        %1525 = vmatmul.mubr.bf16.gmra.mxu0 %v571
        %v1526 = vpop.f32.mrf.mxu0
        %v1527 = vadd.f32 %v440, %v1526
        %v1528 = vpop.f32.mrf.mxu0
        %v1529 = vadd.f32 %v444, %v1528
        %v1530 = vpop.f32.mrf.mxu0
        %v1531 = vadd.f32 %v440, %v1530
        %v1532 = vpop.f32.mrf.mxu0
        %v1533 = vadd.f32 %v444, %v1532
        %1534 = vmatprep.mubr.bf16.mxu0 %v574
        %1535 = vmatmul.mubr.bf16.gmra.mxu0 %v573
        %v1536 = vpop.f32.mrf.mxu0
        %v1537 = vadd.f32 %v440, %v1536
        %v1538 = vpop.f32.mrf.mxu0
        %v1539 = vadd.f32 %v444, %v1538
        %v1540 = vpop.f32.mrf.mxu0
        %v1541 = vadd.f32 %v440, %v1540
        %v1542 = vpop.f32.mrf.mxu0
        %v1543 = vadd.f32 %v444, %v1542
        %1544 = vmatprep.mubr.bf16.mxu0 %v576
        %1545 = vmatmul.mubr.bf16.gmra.mxu0 %v575
        %v1546 = vpop.f32.mrf.mxu0
        %v1547 = vadd.f32 %v440, %v1546
        %v1548 = vpop.f32.mrf.mxu0
        %v1549 = vadd.f32 %v444, %v1548
        %v1550 = vpop.f32.mrf.mxu0
        %v1551 = vadd.f32 %v440, %v1550
        %v1552 = vpop.f32.mrf.mxu0
        %v1553 = vadd.f32 %v444, %v1552
        %1554 = vmatprep.mubr.bf16.mxu0 %v578
        %1555 = vmatmul.mubr.bf16.gmra.mxu0 %v577
        %v1556 = vpop.f32.mrf.mxu0
        %v1557 = vadd.f32 %v440, %v1556
        %v1558 = vpop.f32.mrf.mxu0
        %v1559 = vadd.f32 %v444, %v1558
        %v1560 = vpop.f32.mrf.mxu0
        %v1561 = vadd.f32 %v440, %v1560
        %v1562 = vpop.f32.mrf.mxu0
        %v1563 = vadd.f32 %v444, %v1562
        %1564 = vmatprep.mubr.bf16.mxu0 %v580
        %1565 = vmatmul.mubr.bf16.gmra.mxu0 %v579
        %v1566 = vpop.f32.mrf.mxu0
        %v1567 = vadd.f32 %v440, %v1566
        %v1568 = vpop.f32.mrf.mxu0
        %v1569 = vadd.f32 %v444, %v1568
        %v1570 = vpop.f32.mrf.mxu0
        %v1571 = vadd.f32 %v440, %v1570
        %v1572 = vpop.f32.mrf.mxu0
        %v1573 = vadd.f32 %v444, %v1572
        %1574 = vmatprep.mubr.bf16.mxu0 %v582
        %1575 = vmatmul.mubr.bf16.gmra.mxu0 %v581
        %v1576 = vpop.f32.mrf.mxu0
        %v1577 = vadd.f32 %v440, %v1576
        %v1578 = vpop.f32.mrf.mxu0
        %v1579 = vadd.f32 %v444, %v1578
        %v1580 = vpop.f32.mrf.mxu0
        %v1581 = vadd.f32 %v440, %v1580
        %v1582 = vpop.f32.mrf.mxu0
        %v1583 = vadd.f32 %v444, %v1582
        %1584 = vmatprep.mubr.bf16.mxu0 %v584
        %1585 = vmatmul.mubr.bf16.gmra.mxu0 %v583
        %v1586 = vpop.f32.mrf.mxu0
        %v1587 = vadd.f32 %v440, %v1586
        %v1588 = vpop.f32.mrf.mxu0
        %v1589 = vadd.f32 %v444, %v1588
        %v1590 = vpop.f32.mrf.mxu0
        %v1591 = vadd.f32 %v440, %v1590
        %v1592 = vpop.f32.mrf.mxu0
        %v1593 = vadd.f32 %v444, %v1592
        %1594 = vmatprep.mubr.bf16.mxu0 %v586
        %1595 = vmatmul.mubr.bf16.gmra.mxu0 %v585
        %v1596 = vpop.f32.mrf.mxu0
        %v1597 = vadd.f32 %v440, %v1596
        %v1598 = vpop.f32.mrf.mxu0
        %v1599 = vadd.f32 %v444, %v1598
        %v1600 = vpop.f32.mrf.mxu0
        %v1601 = vadd.f32 %v440, %v1600
        %v1602 = vpop.f32.mrf.mxu0
        %v1603 = vadd.f32 %v444, %v1602
        %1604 = vmatprep.mubr.bf16.mxu0 %v588
        %1605 = vmatmul.mubr.bf16.gmra.mxu0 %v587
        %v1606 = vpop.f32.mrf.mxu0
        %v1607 = vadd.f32 %v440, %v1606
        %v1608 = vpop.f32.mrf.mxu0
        %v1609 = vadd.f32 %v444, %v1608
        %v1610 = vpop.f32.mrf.mxu0
        %v1611 = vadd.f32 %v440, %v1610
        %v1612 = vpop.f32.mrf.mxu0
        %v1613 = vadd.f32 %v444, %v1612
        %1614 = vmatprep.mubr.bf16.mxu0 %v590
        %1615 = vmatmul.mubr.bf16.gmra.mxu0 %v589
        %v1616 = vpop.f32.mrf.mxu0
        %v1617 = vadd.f32 %v440, %v1616
        %v1618 = vpop.f32.mrf.mxu0
        %v1619 = vadd.f32 %v444, %v1618
        %v1620 = vpop.f32.mrf.mxu0
        %v1621 = vadd.f32 %v440, %v1620
        %v1622 = vpop.f32.mrf.mxu0
        %v1623 = vadd.f32 %v444, %v1622
        %1624 = vmatprep.mubr.bf16.mxu0 %v592
        %1625 = vmatmul.mubr.bf16.gmra.mxu0 %v591
        %v1626 = vpop.f32.mrf.mxu0
        %v1627 = vadd.f32 %v440, %v1626
        %v1628 = vpop.f32.mrf.mxu0
        %v1629 = vadd.f32 %v444, %v1628
        %v1630 = vpop.f32.mrf.mxu0
        %v1631 = vadd.f32 %v440, %v1630
        %v1632 = vpop.f32.mrf.mxu0
        %v1633 = vadd.f32 %v444, %v1632
        %1634 = vmatprep.mubr.bf16.mxu0 %v594
        %1635 = vmatmul.mubr.bf16.gmra.mxu0 %v593
        %v1636 = vpop.f32.mrf.mxu0
        %v1637 = vadd.f32 %v440, %v1636
        %v1638 = vpop.f32.mrf.mxu0
        %v1639 = vadd.f32 %v444, %v1638
        %v1640 = vpop.f32.mrf.mxu0
        %v1641 = vadd.f32 %v440, %v1640
        %v1642 = vpop.f32.mrf.mxu0
        %v1643 = vadd.f32 %v444, %v1642
        %1644 = vmatprep.mubr.bf16.mxu0 %v596
        %1645 = vmatmul.mubr.bf16.gmra.mxu0 %v595
        %v1646 = vpop.f32.mrf.mxu0
        %v1647 = vadd.f32 %v440, %v1646
        %v1648 = vpop.f32.mrf.mxu0
        %v1649 = vadd.f32 %v444, %v1648
        %v1650 = vpop.f32.mrf.mxu0
        %v1651 = vadd.f32 %v440, %v1650
        %v1652 = vpop.f32.mrf.mxu0
        %v1653 = vadd.f32 %v444, %v1652
        %1654 = vdwg.mxu0
        %1655 = vmatprep.subr.bf16.mxu0 %v1074
        %1656 = vmatpush1.bf16.msra.mxu0 %v1073
        %1657 = vmatprep.subr.bf16.mxu0 %v1066
        %1658 = vmatpush1.bf16.msra.mxu0 %v1065
        %1659 = vmatprep.subr.bf16.mxu0 %v1058
        %1660 = vmatpush1.bf16.msra.mxu0 %v1057
        %1661 = vmatprep.subr.bf16.mxu0 %v1050
        %1662 = vmatpush1.bf16.msra.mxu0 %v1049
        %1663 = vmatprep.subr.bf16.mxu0 %v1042
        %1664 = vmatpush1.bf16.msra.mxu0 %v1041
        %1665 = vmatprep.subr.bf16.mxu0 %v1034
        %1666 = vmatpush1.bf16.msra.mxu0 %v1033
        %1667 = vmatprep.subr.bf16.mxu0 %v1026
        %1668 = vmatpush1.bf16.msra.mxu0 %v1025
        %1669 = vmatprep.subr.bf16.mxu0 %v1018
        %1670 = vmatpush1.bf16.msra.mxu0 %v1017
        %1671 = vmatprep.subr.bf16.mxu0 %v1138
        %1672 = vmatpush2.bf16.msra.mxu0 %v1137
        %1673 = vmatprep.subr.bf16.mxu0 %v1130
        %1674 = vmatpush2.bf16.msra.mxu0 %v1129
        %1675 = vmatprep.subr.bf16.mxu0 %v1122
        %1676 = vmatpush2.bf16.msra.mxu0 %v1121
        %1677 = vmatprep.subr.bf16.mxu0 %v1114
        %1678 = vmatpush2.bf16.msra.mxu0 %v1113
        %1679 = vmatprep.subr.bf16.mxu0 %v1106
        %1680 = vmatpush2.bf16.msra.mxu0 %v1105
        %1681 = vmatprep.subr.bf16.mxu0 %v1098
        %1682 = vmatpush2.bf16.msra.mxu0 %v1097
        %1683 = vmatprep.subr.bf16.mxu0 %v1090
        %1684 = vmatpush2.bf16.msra.mxu0 %v1089
        %1685 = vmatprep.subr.bf16.mxu0 %v1082
        %1686 = vmatpush2.bf16.msra.mxu0 %v1081
        %1687 = vmatprep.mubr.bf16.mxu0 %v566
        %1688 = vmatmul.mubr.bf16.gmra.mxu0 %v565
        %v1689 = vpop.f32.mrf.mxu0
        %v1690 = vadd.f32 %v448, %v1689
        %v1691 = vpop.f32.mrf.mxu0
        %v1692 = vadd.f32 %v452, %v1691
        %v1693 = vpop.f32.mrf.mxu0
        %v1694 = vadd.f32 %v448, %v1693
        %v1695 = vpop.f32.mrf.mxu0
        %v1696 = vadd.f32 %v452, %v1695
        %1697 = vmatprep.mubr.bf16.mxu0 %v568
        %1698 = vmatmul.mubr.bf16.gmra.mxu0 %v567
        %v1699 = vpop.f32.mrf.mxu0
        %v1700 = vadd.f32 %v448, %v1699
        %v1701 = vpop.f32.mrf.mxu0
        %v1702 = vadd.f32 %v452, %v1701
        %v1703 = vpop.f32.mrf.mxu0
        %v1704 = vadd.f32 %v448, %v1703
        %v1705 = vpop.f32.mrf.mxu0
        %v1706 = vadd.f32 %v452, %v1705
        %1707 = vmatprep.mubr.bf16.mxu0 %v570
        %1708 = vmatmul.mubr.bf16.gmra.mxu0 %v569
        %v1709 = vpop.f32.mrf.mxu0
        %v1710 = vadd.f32 %v448, %v1709
        %v1711 = vpop.f32.mrf.mxu0
        %v1712 = vadd.f32 %v452, %v1711
        %v1713 = vpop.f32.mrf.mxu0
        %v1714 = vadd.f32 %v448, %v1713
        %v1715 = vpop.f32.mrf.mxu0
        %v1716 = vadd.f32 %v452, %v1715
        %1717 = vmatprep.mubr.bf16.mxu0 %v572
        %1718 = vmatmul.mubr.bf16.gmra.mxu0 %v571
        %v1719 = vpop.f32.mrf.mxu0
        %v1720 = vadd.f32 %v448, %v1719
        %v1721 = vpop.f32.mrf.mxu0
        %v1722 = vadd.f32 %v452, %v1721
        %v1723 = vpop.f32.mrf.mxu0
        %v1724 = vadd.f32 %v448, %v1723
        %v1725 = vpop.f32.mrf.mxu0
        %v1726 = vadd.f32 %v452, %v1725
        %1727 = vmatprep.mubr.bf16.mxu0 %v574
        %1728 = vmatmul.mubr.bf16.gmra.mxu0 %v573
        %v1729 = vpop.f32.mrf.mxu0
        %v1730 = vadd.f32 %v448, %v1729
        %v1731 = vpop.f32.mrf.mxu0
        %v1732 = vadd.f32 %v452, %v1731
        %v1733 = vpop.f32.mrf.mxu0
        %v1734 = vadd.f32 %v448, %v1733
        %v1735 = vpop.f32.mrf.mxu0
        %v1736 = vadd.f32 %v452, %v1735
        %1737 = vmatprep.mubr.bf16.mxu0 %v576
        %1738 = vmatmul.mubr.bf16.gmra.mxu0 %v575
        %v1739 = vpop.f32.mrf.mxu0
        %v1740 = vadd.f32 %v448, %v1739
        %v1741 = vpop.f32.mrf.mxu0
        %v1742 = vadd.f32 %v452, %v1741
        %v1743 = vpop.f32.mrf.mxu0
        %v1744 = vadd.f32 %v448, %v1743
        %v1745 = vpop.f32.mrf.mxu0
        %v1746 = vadd.f32 %v452, %v1745
        %1747 = vmatprep.mubr.bf16.mxu0 %v578
        %1748 = vmatmul.mubr.bf16.gmra.mxu0 %v577
        %v1749 = vpop.f32.mrf.mxu0
        %v1750 = vadd.f32 %v448, %v1749
        %v1751 = vpop.f32.mrf.mxu0
        %v1752 = vadd.f32 %v452, %v1751
        %v1753 = vpop.f32.mrf.mxu0
        %v1754 = vadd.f32 %v448, %v1753
        %v1755 = vpop.f32.mrf.mxu0
        %v1756 = vadd.f32 %v452, %v1755
        %1757 = vmatprep.mubr.bf16.mxu0 %v580
        %1758 = vmatmul.mubr.bf16.gmra.mxu0 %v579
        %v1759 = vpop.f32.mrf.mxu0
        %v1760 = vadd.f32 %v448, %v1759
        %v1761 = vpop.f32.mrf.mxu0
        %v1762 = vadd.f32 %v452, %v1761
        %v1763 = vpop.f32.mrf.mxu0
        %v1764 = vadd.f32 %v448, %v1763
        %v1765 = vpop.f32.mrf.mxu0
        %v1766 = vadd.f32 %v452, %v1765
        %1767 = vmatprep.mubr.bf16.mxu0 %v582
        %1768 = vmatmul.mubr.bf16.gmra.mxu0 %v581
        %v1769 = vpop.f32.mrf.mxu0
        %v1770 = vadd.f32 %v448, %v1769
        %v1771 = vpop.f32.mrf.mxu0
        %v1772 = vadd.f32 %v452, %v1771
        %v1773 = vpop.f32.mrf.mxu0
        %v1774 = vadd.f32 %v448, %v1773
        %v1775 = vpop.f32.mrf.mxu0
        %v1776 = vadd.f32 %v452, %v1775
        %1777 = vmatprep.mubr.bf16.mxu0 %v584
        %1778 = vmatmul.mubr.bf16.gmra.mxu0 %v583
        %v1779 = vpop.f32.mrf.mxu0
        %v1780 = vadd.f32 %v448, %v1779
        %v1781 = vpop.f32.mrf.mxu0
        %v1782 = vadd.f32 %v452, %v1781
        %v1783 = vpop.f32.mrf.mxu0
        %v1784 = vadd.f32 %v448, %v1783
        %v1785 = vpop.f32.mrf.mxu0
        %v1786 = vadd.f32 %v452, %v1785
        %1787 = vmatprep.mubr.bf16.mxu0 %v586
        %1788 = vmatmul.mubr.bf16.gmra.mxu0 %v585
        %v1789 = vpop.f32.mrf.mxu0
        %v1790 = vadd.f32 %v448, %v1789
        %v1791 = vpop.f32.mrf.mxu0
        %v1792 = vadd.f32 %v452, %v1791
        %v1793 = vpop.f32.mrf.mxu0
        %v1794 = vadd.f32 %v448, %v1793
        %v1795 = vpop.f32.mrf.mxu0
        %v1796 = vadd.f32 %v452, %v1795
        %1797 = vmatprep.mubr.bf16.mxu0 %v588
        %1798 = vmatmul.mubr.bf16.gmra.mxu0 %v587
        %v1799 = vpop.f32.mrf.mxu0
        %v1800 = vadd.f32 %v448, %v1799
        %v1801 = vpop.f32.mrf.mxu0
        %v1802 = vadd.f32 %v452, %v1801
        %v1803 = vpop.f32.mrf.mxu0
        %v1804 = vadd.f32 %v448, %v1803
        %v1805 = vpop.f32.mrf.mxu0
        %v1806 = vadd.f32 %v452, %v1805
        %1807 = vmatprep.mubr.bf16.mxu0 %v590
        %1808 = vmatmul.mubr.bf16.gmra.mxu0 %v589
        %v1809 = vpop.f32.mrf.mxu0
        %v1810 = vadd.f32 %v448, %v1809
        %v1811 = vpop.f32.mrf.mxu0
        %v1812 = vadd.f32 %v452, %v1811
        %v1813 = vpop.f32.mrf.mxu0
        %v1814 = vadd.f32 %v448, %v1813
        %v1815 = vpop.f32.mrf.mxu0
        %v1816 = vadd.f32 %v452, %v1815
        %1817 = vmatprep.mubr.bf16.mxu0 %v592
        %1818 = vmatmul.mubr.bf16.gmra.mxu0 %v591
        %v1819 = vpop.f32.mrf.mxu0
        %v1820 = vadd.f32 %v448, %v1819
        %v1821 = vpop.f32.mrf.mxu0
        %v1822 = vadd.f32 %v452, %v1821
        %v1823 = vpop.f32.mrf.mxu0
        %v1824 = vadd.f32 %v448, %v1823
        %v1825 = vpop.f32.mrf.mxu0
        %v1826 = vadd.f32 %v452, %v1825
        %1827 = vmatprep.mubr.bf16.mxu0 %v594
        %1828 = vmatmul.mubr.bf16.gmra.mxu0 %v593
        %v1829 = vpop.f32.mrf.mxu0
        %v1830 = vadd.f32 %v448, %v1829
        %v1831 = vpop.f32.mrf.mxu0
        %v1832 = vadd.f32 %v452, %v1831
        %v1833 = vpop.f32.mrf.mxu0
        %v1834 = vadd.f32 %v448, %v1833
        %v1835 = vpop.f32.mrf.mxu0
        %v1836 = vadd.f32 %v452, %v1835
        %1837 = vmatprep.mubr.bf16.mxu0 %v596
        %1838 = vmatmul.mubr.bf16.gmra.mxu0 %v595
        %v1839 = vpop.f32.mrf.mxu0
        %v1840 = vadd.f32 %v448, %v1839
        %v1841 = vpop.f32.mrf.mxu0
        %v1842 = vadd.f32 %v452, %v1841
        %v1843 = vpop.f32.mrf.mxu0
        %v1844 = vadd.f32 %v448, %v1843
        %v1845 = vpop.f32.mrf.mxu0
        %v1846 = vadd.f32 %v452, %v1845
        %1847 = vdwg.mxu0
        %1848 = vmatprep.subr.bf16.mxu0 %v1076
        %1849 = vmatpush1.bf16.msra.mxu0 %v1075
        %1850 = vmatprep.subr.bf16.mxu0 %v1068
        %1851 = vmatpush1.bf16.msra.mxu0 %v1067
        %1852 = vmatprep.subr.bf16.mxu0 %v1060
        %1853 = vmatpush1.bf16.msra.mxu0 %v1059
        %1854 = vmatprep.subr.bf16.mxu0 %v1052
        %1855 = vmatpush1.bf16.msra.mxu0 %v1051
        %1856 = vmatprep.subr.bf16.mxu0 %v1044
        %1857 = vmatpush1.bf16.msra.mxu0 %v1043
        %1858 = vmatprep.subr.bf16.mxu0 %v1036
        %1859 = vmatpush1.bf16.msra.mxu0 %v1035
        %1860 = vmatprep.subr.bf16.mxu0 %v1028
        %1861 = vmatpush1.bf16.msra.mxu0 %v1027
        %1862 = vmatprep.subr.bf16.mxu0 %v1020
        %1863 = vmatpush1.bf16.msra.mxu0 %v1019
        %1864 = vmatprep.subr.bf16.mxu0 %v1140
        %1865 = vmatpush2.bf16.msra.mxu0 %v1139
        %1866 = vmatprep.subr.bf16.mxu0 %v1132
        %1867 = vmatpush2.bf16.msra.mxu0 %v1131
        %1868 = vmatprep.subr.bf16.mxu0 %v1124
        %1869 = vmatpush2.bf16.msra.mxu0 %v1123
        %1870 = vmatprep.subr.bf16.mxu0 %v1116
        %1871 = vmatpush2.bf16.msra.mxu0 %v1115
        %1872 = vmatprep.subr.bf16.mxu0 %v1108
        %1873 = vmatpush2.bf16.msra.mxu0 %v1107
        %1874 = vmatprep.subr.bf16.mxu0 %v1100
        %1875 = vmatpush2.bf16.msra.mxu0 %v1099
        %1876 = vmatprep.subr.bf16.mxu0 %v1092
        %1877 = vmatpush2.bf16.msra.mxu0 %v1091
        %1878 = vmatprep.subr.bf16.mxu0 %v1084
        %1879 = vmatpush2.bf16.msra.mxu0 %v1083
        %1880 = vmatprep.mubr.bf16.mxu0 %v566
        %1881 = vmatmul.mubr.bf16.gmra.mxu0 %v565
        %v1882 = vpop.f32.mrf.mxu0
        %v1883 = vadd.f32 %v456, %v1882
        %v1884 = vpop.f32.mrf.mxu0
        %v1885 = vadd.f32 %v460, %v1884
        %v1886 = vpop.f32.mrf.mxu0
        %v1887 = vadd.f32 %v456, %v1886
        %v1888 = vpop.f32.mrf.mxu0
        %v1889 = vadd.f32 %v460, %v1888
        %1890 = vmatprep.mubr.bf16.mxu0 %v568
        %1891 = vmatmul.mubr.bf16.gmra.mxu0 %v567
        %v1892 = vpop.f32.mrf.mxu0
        %v1893 = vadd.f32 %v456, %v1892
        %v1894 = vpop.f32.mrf.mxu0
        %v1895 = vadd.f32 %v460, %v1894
        %v1896 = vpop.f32.mrf.mxu0
        %v1897 = vadd.f32 %v456, %v1896
        %v1898 = vpop.f32.mrf.mxu0
        %v1899 = vadd.f32 %v460, %v1898
        %1900 = vmatprep.mubr.bf16.mxu0 %v570
        %1901 = vmatmul.mubr.bf16.gmra.mxu0 %v569
        %v1902 = vpop.f32.mrf.mxu0
        %v1903 = vadd.f32 %v456, %v1902
        %v1904 = vpop.f32.mrf.mxu0
        %v1905 = vadd.f32 %v460, %v1904
        %v1906 = vpop.f32.mrf.mxu0
        %v1907 = vadd.f32 %v456, %v1906
        %v1908 = vpop.f32.mrf.mxu0
        %v1909 = vadd.f32 %v460, %v1908
        %1910 = vmatprep.mubr.bf16.mxu0 %v572
        %1911 = vmatmul.mubr.bf16.gmra.mxu0 %v571
        %v1912 = vpop.f32.mrf.mxu0
        %v1913 = vadd.f32 %v456, %v1912
        %v1914 = vpop.f32.mrf.mxu0
        %v1915 = vadd.f32 %v460, %v1914
        %v1916 = vpop.f32.mrf.mxu0
        %v1917 = vadd.f32 %v456, %v1916
        %v1918 = vpop.f32.mrf.mxu0
        %v1919 = vadd.f32 %v460, %v1918
        %1920 = vmatprep.mubr.bf16.mxu0 %v574
        %1921 = vmatmul.mubr.bf16.gmra.mxu0 %v573
        %v1922 = vpop.f32.mrf.mxu0
        %v1923 = vadd.f32 %v456, %v1922
        %v1924 = vpop.f32.mrf.mxu0
        %v1925 = vadd.f32 %v460, %v1924
        %v1926 = vpop.f32.mrf.mxu0
        %v1927 = vadd.f32 %v456, %v1926
        %v1928 = vpop.f32.mrf.mxu0
        %v1929 = vadd.f32 %v460, %v1928
        %1930 = vmatprep.mubr.bf16.mxu0 %v576
        %1931 = vmatmul.mubr.bf16.gmra.mxu0 %v575
        %v1932 = vpop.f32.mrf.mxu0
        %v1933 = vadd.f32 %v456, %v1932
        %v1934 = vpop.f32.mrf.mxu0
        %v1935 = vadd.f32 %v460, %v1934
        %v1936 = vpop.f32.mrf.mxu0
        %v1937 = vadd.f32 %v456, %v1936
        %v1938 = vpop.f32.mrf.mxu0
        %v1939 = vadd.f32 %v460, %v1938
        %1940 = vmatprep.mubr.bf16.mxu0 %v578
        %1941 = vmatmul.mubr.bf16.gmra.mxu0 %v577
        %v1942 = vpop.f32.mrf.mxu0
        %v1943 = vadd.f32 %v456, %v1942
        %v1944 = vpop.f32.mrf.mxu0
        %v1945 = vadd.f32 %v460, %v1944
        %v1946 = vpop.f32.mrf.mxu0
        %v1947 = vadd.f32 %v456, %v1946
        %v1948 = vpop.f32.mrf.mxu0
        %v1949 = vadd.f32 %v460, %v1948
        %1950 = vmatprep.mubr.bf16.mxu0 %v580
        %1951 = vmatmul.mubr.bf16.gmra.mxu0 %v579
        %v1952 = vpop.f32.mrf.mxu0
        %v1953 = vadd.f32 %v456, %v1952
        %v1954 = vpop.f32.mrf.mxu0
        %v1955 = vadd.f32 %v460, %v1954
        %v1956 = vpop.f32.mrf.mxu0
        %v1957 = vadd.f32 %v456, %v1956
        %v1958 = vpop.f32.mrf.mxu0
        %v1959 = vadd.f32 %v460, %v1958
        %1960 = vmatprep.mubr.bf16.mxu0 %v582
        %1961 = vmatmul.mubr.bf16.gmra.mxu0 %v581
        %v1962 = vpop.f32.mrf.mxu0
        %v1963 = vadd.f32 %v456, %v1962
        %v1964 = vpop.f32.mrf.mxu0
        %v1965 = vadd.f32 %v460, %v1964
        %v1966 = vpop.f32.mrf.mxu0
        %v1967 = vadd.f32 %v456, %v1966
        %v1968 = vpop.f32.mrf.mxu0
        %v1969 = vadd.f32 %v460, %v1968
        %1970 = vmatprep.mubr.bf16.mxu0 %v584
        %1971 = vmatmul.mubr.bf16.gmra.mxu0 %v583
        %v1972 = vpop.f32.mrf.mxu0
        %v1973 = vadd.f32 %v456, %v1972
        %v1974 = vpop.f32.mrf.mxu0
        %v1975 = vadd.f32 %v460, %v1974
        %v1976 = vpop.f32.mrf.mxu0
        %v1977 = vadd.f32 %v456, %v1976
        %v1978 = vpop.f32.mrf.mxu0
        %v1979 = vadd.f32 %v460, %v1978
        %1980 = vmatprep.mubr.bf16.mxu0 %v586
        %1981 = vmatmul.mubr.bf16.gmra.mxu0 %v585
        %v1982 = vpop.f32.mrf.mxu0
        %v1983 = vadd.f32 %v456, %v1982
        %v1984 = vpop.f32.mrf.mxu0
        %v1985 = vadd.f32 %v460, %v1984
        %v1986 = vpop.f32.mrf.mxu0
        %v1987 = vadd.f32 %v456, %v1986
        %v1988 = vpop.f32.mrf.mxu0
        %v1989 = vadd.f32 %v460, %v1988
        %1990 = vmatprep.mubr.bf16.mxu0 %v588
        %1991 = vmatmul.mubr.bf16.gmra.mxu0 %v587
        %v1992 = vpop.f32.mrf.mxu0
        %v1993 = vadd.f32 %v456, %v1992
        %v1994 = vpop.f32.mrf.mxu0
        %v1995 = vadd.f32 %v460, %v1994
        %v1996 = vpop.f32.mrf.mxu0
        %v1997 = vadd.f32 %v456, %v1996
        %v1998 = vpop.f32.mrf.mxu0
        %v1999 = vadd.f32 %v460, %v1998
        %2000 = vmatprep.mubr.bf16.mxu0 %v590
        %2001 = vmatmul.mubr.bf16.gmra.mxu0 %v589
        %v2002 = vpop.f32.mrf.mxu0
        %v2003 = vadd.f32 %v456, %v2002
        %v2004 = vpop.f32.mrf.mxu0
        %v2005 = vadd.f32 %v460, %v2004
        %v2006 = vpop.f32.mrf.mxu0
        %v2007 = vadd.f32 %v456, %v2006
        %v2008 = vpop.f32.mrf.mxu0
        %v2009 = vadd.f32 %v460, %v2008
        %2010 = vmatprep.mubr.bf16.mxu0 %v592
        %2011 = vmatmul.mubr.bf16.gmra.mxu0 %v591
        %v2012 = vpop.f32.mrf.mxu0
        %v2013 = vadd.f32 %v456, %v2012
        %v2014 = vpop.f32.mrf.mxu0
        %v2015 = vadd.f32 %v460, %v2014
        %v2016 = vpop.f32.mrf.mxu0
        %v2017 = vadd.f32 %v456, %v2016
        %v2018 = vpop.f32.mrf.mxu0
        %v2019 = vadd.f32 %v460, %v2018
        %2020 = vmatprep.mubr.bf16.mxu0 %v594
        %2021 = vmatmul.mubr.bf16.gmra.mxu0 %v593
        %v2022 = vpop.f32.mrf.mxu0
        %v2023 = vadd.f32 %v456, %v2022
        %v2024 = vpop.f32.mrf.mxu0
        %v2025 = vadd.f32 %v460, %v2024
        %v2026 = vpop.f32.mrf.mxu0
        %v2027 = vadd.f32 %v456, %v2026
        %v2028 = vpop.f32.mrf.mxu0
        %v2029 = vadd.f32 %v460, %v2028
        %2030 = vmatprep.mubr.bf16.mxu0 %v596
        %2031 = vmatmul.mubr.bf16.gmra.mxu0 %v595
        %v2032 = vpop.f32.mrf.mxu0
        %v2033 = vadd.f32 %v456, %v2032
        %v2034 = vpop.f32.mrf.mxu0
        %v2035 = vadd.f32 %v460, %v2034
        %v2036 = vpop.f32.mrf.mxu0
        %v2037 = vadd.f32 %v456, %v2036
        %v2038 = vpop.f32.mrf.mxu0
        %v2039 = vadd.f32 %v460, %v2038
        %2040 = vdwg.mxu0
        %v2041 = vmax.f32 %v1304, 0.0
        %v2042 = vmax.f32 %v1306, 0.0
        %v2043 = vmax.f32 %v1497, 0.0
        %v2044 = vmax.f32 %v1499, 0.0
        %v2045 = vmax.f32 %v1690, 0.0
        %v2046 = vmax.f32 %v1692, 0.0
        %v2047 = vmax.f32 %v1883, 0.0
        %v2048 = vmax.f32 %v1885, 0.0
        %v2049 = vmax.f32 %v1308, 0.0
        %v2050 = vmax.f32 %v1310, 0.0
        %v2051 = vmax.f32 %v1501, 0.0
        %v2052 = vmax.f32 %v1503, 0.0
        %v2053 = vmax.f32 %v1694, 0.0
        %v2054 = vmax.f32 %v1696, 0.0
        %v2055 = vmax.f32 %v1887, 0.0
        %v2056 = vmax.f32 %v1889, 0.0
        %v2057 = vmax.f32 %v1314, 0.0
        %v2058 = vmax.f32 %v1316, 0.0
        %v2059 = vmax.f32 %v1507, 0.0
        %v2060 = vmax.f32 %v1509, 0.0
        %v2061 = vmax.f32 %v1700, 0.0
        %v2062 = vmax.f32 %v1702, 0.0
        %v2063 = vmax.f32 %v1893, 0.0
        %v2064 = vmax.f32 %v1895, 0.0
        %v2065 = vmax.f32 %v1318, 0.0
        %v2066 = vmax.f32 %v1320, 0.0
        %v2067 = vmax.f32 %v1511, 0.0
        %v2068 = vmax.f32 %v1513, 0.0
        %v2069 = vmax.f32 %v1704, 0.0
        %v2070 = vmax.f32 %v1706, 0.0
        %v2071 = vmax.f32 %v1897, 0.0
        %v2072 = vmax.f32 %v1899, 0.0
        %v2073 = vmax.f32 %v1324, 0.0
        %v2074 = vmax.f32 %v1326, 0.0
        %v2075 = vmax.f32 %v1517, 0.0
        %v2076 = vmax.f32 %v1519, 0.0
        %v2077 = vmax.f32 %v1710, 0.0
        %v2078 = vmax.f32 %v1712, 0.0
        %v2079 = vmax.f32 %v1903, 0.0
        %v2080 = vmax.f32 %v1905, 0.0
        %v2081 = vmax.f32 %v1328, 0.0
        %v2082 = vmax.f32 %v1330, 0.0
        %v2083 = vmax.f32 %v1521, 0.0
        %v2084 = vmax.f32 %v1523, 0.0
        %v2085 = vmax.f32 %v1714, 0.0
        %v2086 = vmax.f32 %v1716, 0.0
        %v2087 = vmax.f32 %v1907, 0.0
        %v2088 = vmax.f32 %v1909, 0.0
        %v2089 = vmax.f32 %v1334, 0.0
        %v2090 = vmax.f32 %v1336, 0.0
        %v2091 = vmax.f32 %v1527, 0.0
        %v2092 = vmax.f32 %v1529, 0.0
        %v2093 = vmax.f32 %v1720, 0.0
        %v2094 = vmax.f32 %v1722, 0.0
        %v2095 = vmax.f32 %v1913, 0.0
        %v2096 = vmax.f32 %v1915, 0.0
        %v2097 = vmax.f32 %v1338, 0.0
        %v2098 = vmax.f32 %v1340, 0.0
        %v2099 = vmax.f32 %v1531, 0.0
        %v2100 = vmax.f32 %v1533, 0.0
        %v2101 = vmax.f32 %v1724, 0.0
        %v2102 = vmax.f32 %v1726, 0.0
        %v2103 = vmax.f32 %v1917, 0.0
        %v2104 = vmax.f32 %v1919, 0.0
        %v2105 = vmax.f32 %v1344, 0.0
        %v2106 = vmax.f32 %v1346, 0.0
        %v2107 = vmax.f32 %v1537, 0.0
        %v2108 = vmax.f32 %v1539, 0.0
        %v2109 = vmax.f32 %v1730, 0.0
        %v2110 = vmax.f32 %v1732, 0.0
        %v2111 = vmax.f32 %v1923, 0.0
        %v2112 = vmax.f32 %v1925, 0.0
        %v2113 = vmax.f32 %v1348, 0.0
        %v2114 = vmax.f32 %v1350, 0.0
        %v2115 = vmax.f32 %v1541, 0.0
        %v2116 = vmax.f32 %v1543, 0.0
        %v2117 = vmax.f32 %v1734, 0.0
        %v2118 = vmax.f32 %v1736, 0.0
        %v2119 = vmax.f32 %v1927, 0.0
        %v2120 = vmax.f32 %v1929, 0.0
        %v2121 = vmax.f32 %v1354, 0.0
        %v2122 = vmax.f32 %v1356, 0.0
        %v2123 = vmax.f32 %v1547, 0.0
        %v2124 = vmax.f32 %v1549, 0.0
        %v2125 = vmax.f32 %v1740, 0.0
        %v2126 = vmax.f32 %v1742, 0.0
        %v2127 = vmax.f32 %v1933, 0.0
        %v2128 = vmax.f32 %v1935, 0.0
        %v2129 = vmax.f32 %v1358, 0.0
        %v2130 = vmax.f32 %v1360, 0.0
        %v2131 = vmax.f32 %v1551, 0.0
        %v2132 = vmax.f32 %v1553, 0.0
        %v2133 = vmax.f32 %v1744, 0.0
        %v2134 = vmax.f32 %v1746, 0.0
        %v2135 = vmax.f32 %v1937, 0.0
        %v2136 = vmax.f32 %v1939, 0.0
        %v2137 = vmax.f32 %v1364, 0.0
        %v2138 = vmax.f32 %v1366, 0.0
        %v2139 = vmax.f32 %v1557, 0.0
        %v2140 = vmax.f32 %v1559, 0.0
        %v2141 = vmax.f32 %v1750, 0.0
        %v2142 = vmax.f32 %v1752, 0.0
        %v2143 = vmax.f32 %v1943, 0.0
        %v2144 = vmax.f32 %v1945, 0.0
        %v2145 = vmax.f32 %v1368, 0.0
        %v2146 = vmax.f32 %v1370, 0.0
        %v2147 = vmax.f32 %v1561, 0.0
        %v2148 = vmax.f32 %v1563, 0.0
        %v2149 = vmax.f32 %v1754, 0.0
        %v2150 = vmax.f32 %v1756, 0.0
        %v2151 = vmax.f32 %v1947, 0.0
        %v2152 = vmax.f32 %v1949, 0.0
        %v2153 = vmax.f32 %v1374, 0.0
        %v2154 = vmax.f32 %v1376, 0.0
        %v2155 = vmax.f32 %v1567, 0.0
        %v2156 = vmax.f32 %v1569, 0.0
        %v2157 = vmax.f32 %v1760, 0.0
        %v2158 = vmax.f32 %v1762, 0.0
        %v2159 = vmax.f32 %v1953, 0.0
        %v2160 = vmax.f32 %v1955, 0.0
        %v2161 = vmax.f32 %v1378, 0.0
        %v2162 = vmax.f32 %v1380, 0.0
        %v2163 = vmax.f32 %v1571, 0.0
        %v2164 = vmax.f32 %v1573, 0.0
        %v2165 = vmax.f32 %v1764, 0.0
        %v2166 = vmax.f32 %v1766, 0.0
        %v2167 = vmax.f32 %v1957, 0.0
        %v2168 = vmax.f32 %v1959, 0.0
        %v2169 = vmax.f32 %v1384, 0.0
        %v2170 = vmax.f32 %v1386, 0.0
        %v2171 = vmax.f32 %v1577, 0.0
        %v2172 = vmax.f32 %v1579, 0.0
        %v2173 = vmax.f32 %v1770, 0.0
        %v2174 = vmax.f32 %v1772, 0.0
        %v2175 = vmax.f32 %v1963, 0.0
        %v2176 = vmax.f32 %v1965, 0.0
        %v2177 = vmax.f32 %v1388, 0.0
        %v2178 = vmax.f32 %v1390, 0.0
        %v2179 = vmax.f32 %v1581, 0.0
        %v2180 = vmax.f32 %v1583, 0.0
        %v2181 = vmax.f32 %v1774, 0.0
        %v2182 = vmax.f32 %v1776, 0.0
        %v2183 = vmax.f32 %v1967, 0.0
        %v2184 = vmax.f32 %v1969, 0.0
        %v2185 = vmax.f32 %v1394, 0.0
        %v2186 = vmax.f32 %v1396, 0.0
        %v2187 = vmax.f32 %v1587, 0.0
        %v2188 = vmax.f32 %v1589, 0.0
        %v2189 = vmax.f32 %v1780, 0.0
        %v2190 = vmax.f32 %v1782, 0.0
        %v2191 = vmax.f32 %v1973, 0.0
        %v2192 = vmax.f32 %v1975, 0.0
        %v2193 = vmax.f32 %v1398, 0.0
        %v2194 = vmax.f32 %v1400, 0.0
        %v2195 = vmax.f32 %v1591, 0.0
        %v2196 = vmax.f32 %v1593, 0.0
        %v2197 = vmax.f32 %v1784, 0.0
        %v2198 = vmax.f32 %v1786, 0.0
        %v2199 = vmax.f32 %v1977, 0.0
        %v2200 = vmax.f32 %v1979, 0.0
        %v2201 = vmax.f32 %v1404, 0.0
        %v2202 = vmax.f32 %v1406, 0.0
        %v2203 = vmax.f32 %v1597, 0.0
        %v2204 = vmax.f32 %v1599, 0.0
        %v2205 = vmax.f32 %v1790, 0.0
        %v2206 = vmax.f32 %v1792, 0.0
        %v2207 = vmax.f32 %v1983, 0.0
        %v2208 = vmax.f32 %v1985, 0.0
        %v2209 = vmax.f32 %v1408, 0.0
        %v2210 = vmax.f32 %v1410, 0.0
        %v2211 = vmax.f32 %v1601, 0.0
        %v2212 = vmax.f32 %v1603, 0.0
        %v2213 = vmax.f32 %v1794, 0.0
        %v2214 = vmax.f32 %v1796, 0.0
        %v2215 = vmax.f32 %v1987, 0.0
        %v2216 = vmax.f32 %v1989, 0.0
        %v2217 = vmax.f32 %v1414, 0.0
        %v2218 = vmax.f32 %v1416, 0.0
        %v2219 = vmax.f32 %v1607, 0.0
        %v2220 = vmax.f32 %v1609, 0.0
        %v2221 = vmax.f32 %v1800, 0.0
        %v2222 = vmax.f32 %v1802, 0.0
        %v2223 = vmax.f32 %v1993, 0.0
        %v2224 = vmax.f32 %v1995, 0.0
        %v2225 = vmax.f32 %v1418, 0.0
        %v2226 = vmax.f32 %v1420, 0.0
        %v2227 = vmax.f32 %v1611, 0.0
        %v2228 = vmax.f32 %v1613, 0.0
        %v2229 = vmax.f32 %v1804, 0.0
        %v2230 = vmax.f32 %v1806, 0.0
        %v2231 = vmax.f32 %v1997, 0.0
        %v2232 = vmax.f32 %v1999, 0.0
        %v2233 = vmax.f32 %v1424, 0.0
        %v2234 = vmax.f32 %v1426, 0.0
        %v2235 = vmax.f32 %v1617, 0.0
        %v2236 = vmax.f32 %v1619, 0.0
        %v2237 = vmax.f32 %v1810, 0.0
        %v2238 = vmax.f32 %v1812, 0.0
        %v2239 = vmax.f32 %v2003, 0.0
        %v2240 = vmax.f32 %v2005, 0.0
        %v2241 = vmax.f32 %v1428, 0.0
        %v2242 = vmax.f32 %v1430, 0.0
        %v2243 = vmax.f32 %v1621, 0.0
        %v2244 = vmax.f32 %v1623, 0.0
        %v2245 = vmax.f32 %v1814, 0.0
        %v2246 = vmax.f32 %v1816, 0.0
        %v2247 = vmax.f32 %v2007, 0.0
        %v2248 = vmax.f32 %v2009, 0.0
        %v2249 = vmax.f32 %v1434, 0.0
        %v2250 = vmax.f32 %v1436, 0.0
        %v2251 = vmax.f32 %v1627, 0.0
        %v2252 = vmax.f32 %v1629, 0.0
        %v2253 = vmax.f32 %v1820, 0.0
        %v2254 = vmax.f32 %v1822, 0.0
        %v2255 = vmax.f32 %v2013, 0.0
        %v2256 = vmax.f32 %v2015, 0.0
        %v2257 = vmax.f32 %v1438, 0.0
        %v2258 = vmax.f32 %v1440, 0.0
        %v2259 = vmax.f32 %v1631, 0.0
        %v2260 = vmax.f32 %v1633, 0.0
        %v2261 = vmax.f32 %v1824, 0.0
        %v2262 = vmax.f32 %v1826, 0.0
        %v2263 = vmax.f32 %v2017, 0.0
        %v2264 = vmax.f32 %v2019, 0.0
        %v2265 = vmax.f32 %v1444, 0.0
        %v2266 = vmax.f32 %v1446, 0.0
        %v2267 = vmax.f32 %v1637, 0.0
        %v2268 = vmax.f32 %v1639, 0.0
        %v2269 = vmax.f32 %v1830, 0.0
        %v2270 = vmax.f32 %v1832, 0.0
        %v2271 = vmax.f32 %v2023, 0.0
        %v2272 = vmax.f32 %v2025, 0.0
        %v2273 = vmax.f32 %v1448, 0.0
        %v2274 = vmax.f32 %v1450, 0.0
        %v2275 = vmax.f32 %v1641, 0.0
        %v2276 = vmax.f32 %v1643, 0.0
        %v2277 = vmax.f32 %v1834, 0.0
        %v2278 = vmax.f32 %v1836, 0.0
        %v2279 = vmax.f32 %v2027, 0.0
        %v2280 = vmax.f32 %v2029, 0.0
        %v2281 = vmax.f32 %v1454, 0.0
        %v2282 = vmax.f32 %v1456, 0.0
        %v2283 = vmax.f32 %v1647, 0.0
        %v2284 = vmax.f32 %v1649, 0.0
        %v2285 = vmax.f32 %v1840, 0.0
        %v2286 = vmax.f32 %v1842, 0.0
        %v2287 = vmax.f32 %v2033, 0.0
        %v2288 = vmax.f32 %v2035, 0.0
        %v2289 = vmax.f32 %v1458, 0.0
        %v2290 = vmax.f32 %v1460, 0.0
        %v2291 = vmax.f32 %v1651, 0.0
        %v2292 = vmax.f32 %v1653, 0.0
        %v2293 = vmax.f32 %v1844, 0.0
        %v2294 = vmax.f32 %v1846, 0.0
        %v2295 = vmax.f32 %v2037, 0.0
        %v2296 = vmax.f32 %v2039, 0.0
        %v2297 = vpack.c.bf16 %v2049, %v2041
        %v2298 = vpack.c.bf16 %v2050, %v2042
        %v2299 = vpack.c.bf16 %v2051, %v2043
        %v2300 = vpack.c.bf16 %v2052, %v2044
        %v2301 = vpack.c.bf16 %v2053, %v2045
        %v2302 = vpack.c.bf16 %v2054, %v2046
        %v2303 = vpack.c.bf16 %v2055, %v2047
        %v2304 = vpack.c.bf16 %v2056, %v2048
        %v2305 = vpack.c.bf16 %v2065, %v2057
        %v2306 = vpack.c.bf16 %v2066, %v2058
        %v2307 = vpack.c.bf16 %v2067, %v2059
        %v2308 = vpack.c.bf16 %v2068, %v2060
        %v2309 = vpack.c.bf16 %v2069, %v2061
        %v2310 = vpack.c.bf16 %v2070, %v2062
        %v2311 = vpack.c.bf16 %v2071, %v2063
        %v2312 = vpack.c.bf16 %v2072, %v2064
        %v2313 = vpack.c.bf16 %v2081, %v2073
        %v2314 = vpack.c.bf16 %v2082, %v2074
        %v2315 = vpack.c.bf16 %v2083, %v2075
        %v2316 = vpack.c.bf16 %v2084, %v2076
        %v2317 = vpack.c.bf16 %v2085, %v2077
        %v2318 = vpack.c.bf16 %v2086, %v2078
        %v2319 = vpack.c.bf16 %v2087, %v2079
        %v2320 = vpack.c.bf16 %v2088, %v2080
        %v2321 = vpack.c.bf16 %v2097, %v2089
        %v2322 = vpack.c.bf16 %v2098, %v2090
        %v2323 = vpack.c.bf16 %v2099, %v2091
        %v2324 = vpack.c.bf16 %v2100, %v2092
        %v2325 = vpack.c.bf16 %v2101, %v2093
        %v2326 = vpack.c.bf16 %v2102, %v2094
        %v2327 = vpack.c.bf16 %v2103, %v2095
        %v2328 = vpack.c.bf16 %v2104, %v2096
        %v2329 = vpack.c.bf16 %v2113, %v2105
        %v2330 = vpack.c.bf16 %v2114, %v2106
        %v2331 = vpack.c.bf16 %v2115, %v2107
        %v2332 = vpack.c.bf16 %v2116, %v2108
        %v2333 = vpack.c.bf16 %v2117, %v2109
        %v2334 = vpack.c.bf16 %v2118, %v2110
        %v2335 = vpack.c.bf16 %v2119, %v2111
        %v2336 = vpack.c.bf16 %v2120, %v2112
        %v2337 = vpack.c.bf16 %v2129, %v2121
        %v2338 = vpack.c.bf16 %v2130, %v2122
        %v2339 = vpack.c.bf16 %v2131, %v2123
        %v2340 = vpack.c.bf16 %v2132, %v2124
        %v2341 = vpack.c.bf16 %v2133, %v2125
        %v2342 = vpack.c.bf16 %v2134, %v2126
        %v2343 = vpack.c.bf16 %v2135, %v2127
        %v2344 = vpack.c.bf16 %v2136, %v2128
        %v2345 = vpack.c.bf16 %v2145, %v2137
        %v2346 = vpack.c.bf16 %v2146, %v2138
        %v2347 = vpack.c.bf16 %v2147, %v2139
        %v2348 = vpack.c.bf16 %v2148, %v2140
        %v2349 = vpack.c.bf16 %v2149, %v2141
        %v2350 = vpack.c.bf16 %v2150, %v2142
        %v2351 = vpack.c.bf16 %v2151, %v2143
        %v2352 = vpack.c.bf16 %v2152, %v2144
        %v2353 = vpack.c.bf16 %v2161, %v2153
        %v2354 = vpack.c.bf16 %v2162, %v2154
        %v2355 = vpack.c.bf16 %v2163, %v2155
        %v2356 = vpack.c.bf16 %v2164, %v2156
        %v2357 = vpack.c.bf16 %v2165, %v2157
        %v2358 = vpack.c.bf16 %v2166, %v2158
        %v2359 = vpack.c.bf16 %v2167, %v2159
        %v2360 = vpack.c.bf16 %v2168, %v2160
        %v2361 = vpack.c.bf16 %v2177, %v2169
        %v2362 = vpack.c.bf16 %v2178, %v2170
        %v2363 = vpack.c.bf16 %v2179, %v2171
        %v2364 = vpack.c.bf16 %v2180, %v2172
        %v2365 = vpack.c.bf16 %v2181, %v2173
        %v2366 = vpack.c.bf16 %v2182, %v2174
        %v2367 = vpack.c.bf16 %v2183, %v2175
        %v2368 = vpack.c.bf16 %v2184, %v2176
        %v2369 = vpack.c.bf16 %v2193, %v2185
        %v2370 = vpack.c.bf16 %v2194, %v2186
        %v2371 = vpack.c.bf16 %v2195, %v2187
        %v2372 = vpack.c.bf16 %v2196, %v2188
        %v2373 = vpack.c.bf16 %v2197, %v2189
        %v2374 = vpack.c.bf16 %v2198, %v2190
        %v2375 = vpack.c.bf16 %v2199, %v2191
        %v2376 = vpack.c.bf16 %v2200, %v2192
        %v2377 = vpack.c.bf16 %v2209, %v2201
        %v2378 = vpack.c.bf16 %v2210, %v2202
        %v2379 = vpack.c.bf16 %v2211, %v2203
        %v2380 = vpack.c.bf16 %v2212, %v2204
        %v2381 = vpack.c.bf16 %v2213, %v2205
        %v2382 = vpack.c.bf16 %v2214, %v2206
        %v2383 = vpack.c.bf16 %v2215, %v2207
        %v2384 = vpack.c.bf16 %v2216, %v2208
        %v2385 = vpack.c.bf16 %v2225, %v2217
        %v2386 = vpack.c.bf16 %v2226, %v2218
        %v2387 = vpack.c.bf16 %v2227, %v2219
        %v2388 = vpack.c.bf16 %v2228, %v2220
        %v2389 = vpack.c.bf16 %v2229, %v2221
        %v2390 = vpack.c.bf16 %v2230, %v2222
        %v2391 = vpack.c.bf16 %v2231, %v2223
        %v2392 = vpack.c.bf16 %v2232, %v2224
        %v2393 = vpack.c.bf16 %v2241, %v2233
        %v2394 = vpack.c.bf16 %v2242, %v2234
        %v2395 = vpack.c.bf16 %v2243, %v2235
        %v2396 = vpack.c.bf16 %v2244, %v2236
        %v2397 = vpack.c.bf16 %v2245, %v2237
        %v2398 = vpack.c.bf16 %v2246, %v2238
        %v2399 = vpack.c.bf16 %v2247, %v2239
        %v2400 = vpack.c.bf16 %v2248, %v2240
        %v2401 = vpack.c.bf16 %v2257, %v2249
        %v2402 = vpack.c.bf16 %v2258, %v2250
        %v2403 = vpack.c.bf16 %v2259, %v2251
        %v2404 = vpack.c.bf16 %v2260, %v2252
        %v2405 = vpack.c.bf16 %v2261, %v2253
        %v2406 = vpack.c.bf16 %v2262, %v2254
        %v2407 = vpack.c.bf16 %v2263, %v2255
        %v2408 = vpack.c.bf16 %v2264, %v2256
        %v2409 = vpack.c.bf16 %v2273, %v2265
        %v2410 = vpack.c.bf16 %v2274, %v2266
        %v2411 = vpack.c.bf16 %v2275, %v2267
        %v2412 = vpack.c.bf16 %v2276, %v2268
        %v2413 = vpack.c.bf16 %v2277, %v2269
        %v2414 = vpack.c.bf16 %v2278, %v2270
        %v2415 = vpack.c.bf16 %v2279, %v2271
        %v2416 = vpack.c.bf16 %v2280, %v2272
        %v2417 = vpack.c.bf16 %v2289, %v2281
        %v2418 = vpack.c.bf16 %v2290, %v2282
        %v2419 = vpack.c.bf16 %v2291, %v2283
        %v2420 = vpack.c.bf16 %v2292, %v2284
        %v2421 = vpack.c.bf16 %v2293, %v2285
        %v2422 = vpack.c.bf16 %v2294, %v2286
        %v2423 = vpack.c.bf16 %v2295, %v2287
        %v2424 = vpack.c.bf16 %v2296, %v2288
        %v2553 = vunpack.c.l.b16 %v2297
        %v2554 = vunpack.c.l.b16 %v2298
        %v2555 = vunpack.c.l.b16 %v2299
        %v2556 = vunpack.c.l.b16 %v2300
        %v2557 = vunpack.c.l.b16 %v2301
        %v2558 = vunpack.c.l.b16 %v2302
        %v2559 = vunpack.c.l.b16 %v2303
        %v2560 = vunpack.c.l.b16 %v2304
        %v2561 = vunpack.c.h.b16 %v2297
        %v2562 = vunpack.c.h.b16 %v2298
        %v2563 = vunpack.c.h.b16 %v2299
        %v2564 = vunpack.c.h.b16 %v2300
        %v2565 = vunpack.c.h.b16 %v2301
        %v2566 = vunpack.c.h.b16 %v2302
        %v2567 = vunpack.c.h.b16 %v2303
        %v2568 = vunpack.c.h.b16 %v2304
        %v2569 = vunpack.c.l.b16 %v2305
        %v2570 = vunpack.c.l.b16 %v2306
        %v2571 = vunpack.c.l.b16 %v2307
        %v2572 = vunpack.c.l.b16 %v2308
        %v2573 = vunpack.c.l.b16 %v2309
        %v2574 = vunpack.c.l.b16 %v2310
        %v2575 = vunpack.c.l.b16 %v2311
        %v2576 = vunpack.c.l.b16 %v2312
        %v2577 = vunpack.c.h.b16 %v2305
        %v2578 = vunpack.c.h.b16 %v2306
        %v2579 = vunpack.c.h.b16 %v2307
        %v2580 = vunpack.c.h.b16 %v2308
        %v2581 = vunpack.c.h.b16 %v2309
        %v2582 = vunpack.c.h.b16 %v2310
        %v2583 = vunpack.c.h.b16 %v2311
        %v2584 = vunpack.c.h.b16 %v2312
        %v2585 = vunpack.c.l.b16 %v2313
        %v2586 = vunpack.c.l.b16 %v2314
        %v2587 = vunpack.c.l.b16 %v2315
        %v2588 = vunpack.c.l.b16 %v2316
        %v2589 = vunpack.c.l.b16 %v2317
        %v2590 = vunpack.c.l.b16 %v2318
        %v2591 = vunpack.c.l.b16 %v2319
        %v2592 = vunpack.c.l.b16 %v2320
        %v2593 = vunpack.c.h.b16 %v2313
        %v2594 = vunpack.c.h.b16 %v2314
        %v2595 = vunpack.c.h.b16 %v2315
        %v2596 = vunpack.c.h.b16 %v2316
        %v2597 = vunpack.c.h.b16 %v2317
        %v2598 = vunpack.c.h.b16 %v2318
        %v2599 = vunpack.c.h.b16 %v2319
        %v2600 = vunpack.c.h.b16 %v2320
        %v2601 = vunpack.c.l.b16 %v2321
        %v2602 = vunpack.c.l.b16 %v2322
        %v2603 = vunpack.c.l.b16 %v2323
        %v2604 = vunpack.c.l.b16 %v2324
        %v2605 = vunpack.c.l.b16 %v2325
        %v2606 = vunpack.c.l.b16 %v2326
        %v2607 = vunpack.c.l.b16 %v2327
        %v2608 = vunpack.c.l.b16 %v2328
        %v2609 = vunpack.c.h.b16 %v2321
        %v2610 = vunpack.c.h.b16 %v2322
        %v2611 = vunpack.c.h.b16 %v2323
        %v2612 = vunpack.c.h.b16 %v2324
        %v2613 = vunpack.c.h.b16 %v2325
        %v2614 = vunpack.c.h.b16 %v2326
        %v2615 = vunpack.c.h.b16 %v2327
        %v2616 = vunpack.c.h.b16 %v2328
        %v2617 = vunpack.c.l.b16 %v2329
        %v2618 = vunpack.c.l.b16 %v2330
        %v2619 = vunpack.c.l.b16 %v2331
        %v2620 = vunpack.c.l.b16 %v2332
        %v2621 = vunpack.c.l.b16 %v2333
        %v2622 = vunpack.c.l.b16 %v2334
        %v2623 = vunpack.c.l.b16 %v2335
        %v2624 = vunpack.c.l.b16 %v2336
        %v2625 = vunpack.c.h.b16 %v2329
        %v2626 = vunpack.c.h.b16 %v2330
        %v2627 = vunpack.c.h.b16 %v2331
        %v2628 = vunpack.c.h.b16 %v2332
        %v2629 = vunpack.c.h.b16 %v2333
        %v2630 = vunpack.c.h.b16 %v2334
        %v2631 = vunpack.c.h.b16 %v2335
        %v2632 = vunpack.c.h.b16 %v2336
        %v2633 = vunpack.c.l.b16 %v2337
        %v2634 = vunpack.c.l.b16 %v2338
        %v2635 = vunpack.c.l.b16 %v2339
        %v2636 = vunpack.c.l.b16 %v2340
        %v2637 = vunpack.c.l.b16 %v2341
        %v2638 = vunpack.c.l.b16 %v2342
        %v2639 = vunpack.c.l.b16 %v2343
        %v2640 = vunpack.c.l.b16 %v2344
        %v2641 = vunpack.c.h.b16 %v2337
        %v2642 = vunpack.c.h.b16 %v2338
        %v2643 = vunpack.c.h.b16 %v2339
        %v2644 = vunpack.c.h.b16 %v2340
        %v2645 = vunpack.c.h.b16 %v2341
        %v2646 = vunpack.c.h.b16 %v2342
        %v2647 = vunpack.c.h.b16 %v2343
        %v2648 = vunpack.c.h.b16 %v2344
        %v2649 = vunpack.c.l.b16 %v2345
        %v2650 = vunpack.c.l.b16 %v2346
        %v2651 = vunpack.c.l.b16 %v2347
        %v2652 = vunpack.c.l.b16 %v2348
        %v2653 = vunpack.c.l.b16 %v2349
        %v2654 = vunpack.c.l.b16 %v2350
        %v2655 = vunpack.c.l.b16 %v2351
        %v2656 = vunpack.c.l.b16 %v2352
        %v2657 = vunpack.c.h.b16 %v2345
        %v2658 = vunpack.c.h.b16 %v2346
        %v2659 = vunpack.c.h.b16 %v2347
        %v2660 = vunpack.c.h.b16 %v2348
        %v2661 = vunpack.c.h.b16 %v2349
        %v2662 = vunpack.c.h.b16 %v2350
        %v2663 = vunpack.c.h.b16 %v2351
        %v2664 = vunpack.c.h.b16 %v2352
        %v2665 = vunpack.c.l.b16 %v2353
        %v2666 = vunpack.c.l.b16 %v2354
        %v2667 = vunpack.c.l.b16 %v2355
        %v2668 = vunpack.c.l.b16 %v2356
        %v2669 = vunpack.c.l.b16 %v2357
        %v2670 = vunpack.c.l.b16 %v2358
        %v2671 = vunpack.c.l.b16 %v2359
        %v2672 = vunpack.c.l.b16 %v2360
        %v2673 = vunpack.c.h.b16 %v2353
        %v2674 = vunpack.c.h.b16 %v2354
        %v2675 = vunpack.c.h.b16 %v2355
        %v2676 = vunpack.c.h.b16 %v2356
        %v2677 = vunpack.c.h.b16 %v2357
        %v2678 = vunpack.c.h.b16 %v2358
        %v2679 = vunpack.c.h.b16 %v2359
        %v2680 = vunpack.c.h.b16 %v2360
        %v2681 = vunpack.c.l.b16 %v2361
        %v2682 = vunpack.c.l.b16 %v2362
        %v2683 = vunpack.c.l.b16 %v2363
        %v2684 = vunpack.c.l.b16 %v2364
        %v2685 = vunpack.c.l.b16 %v2365
        %v2686 = vunpack.c.l.b16 %v2366
        %v2687 = vunpack.c.l.b16 %v2367
        %v2688 = vunpack.c.l.b16 %v2368
        %v2689 = vunpack.c.h.b16 %v2361
        %v2690 = vunpack.c.h.b16 %v2362
        %v2691 = vunpack.c.h.b16 %v2363
        %v2692 = vunpack.c.h.b16 %v2364
        %v2693 = vunpack.c.h.b16 %v2365
        %v2694 = vunpack.c.h.b16 %v2366
        %v2695 = vunpack.c.h.b16 %v2367
        %v2696 = vunpack.c.h.b16 %v2368
        %v2697 = vunpack.c.l.b16 %v2369
        %v2698 = vunpack.c.l.b16 %v2370
        %v2699 = vunpack.c.l.b16 %v2371
        %v2700 = vunpack.c.l.b16 %v2372
        %v2701 = vunpack.c.l.b16 %v2373
        %v2702 = vunpack.c.l.b16 %v2374
        %v2703 = vunpack.c.l.b16 %v2375
        %v2704 = vunpack.c.l.b16 %v2376
        %v2705 = vunpack.c.h.b16 %v2369
        %v2706 = vunpack.c.h.b16 %v2370
        %v2707 = vunpack.c.h.b16 %v2371
        %v2708 = vunpack.c.h.b16 %v2372
        %v2709 = vunpack.c.h.b16 %v2373
        %v2710 = vunpack.c.h.b16 %v2374
        %v2711 = vunpack.c.h.b16 %v2375
        %v2712 = vunpack.c.h.b16 %v2376
        %v2713 = vunpack.c.l.b16 %v2377
        %v2714 = vunpack.c.l.b16 %v2378
        %v2715 = vunpack.c.l.b16 %v2379
        %v2716 = vunpack.c.l.b16 %v2380
        %v2717 = vunpack.c.l.b16 %v2381
        %v2718 = vunpack.c.l.b16 %v2382
        %v2719 = vunpack.c.l.b16 %v2383
        %v2720 = vunpack.c.l.b16 %v2384
        %v2721 = vunpack.c.h.b16 %v2377
        %v2722 = vunpack.c.h.b16 %v2378
        %v2723 = vunpack.c.h.b16 %v2379
        %v2724 = vunpack.c.h.b16 %v2380
        %v2725 = vunpack.c.h.b16 %v2381
        %v2726 = vunpack.c.h.b16 %v2382
        %v2727 = vunpack.c.h.b16 %v2383
        %v2728 = vunpack.c.h.b16 %v2384
        %v2729 = vunpack.c.l.b16 %v2385
        %v2730 = vunpack.c.l.b16 %v2386
        %v2731 = vunpack.c.l.b16 %v2387
        %v2732 = vunpack.c.l.b16 %v2388
        %v2733 = vunpack.c.l.b16 %v2389
        %v2734 = vunpack.c.l.b16 %v2390
        %v2735 = vunpack.c.l.b16 %v2391
        %v2736 = vunpack.c.l.b16 %v2392
        %v2737 = vunpack.c.h.b16 %v2385
        %v2738 = vunpack.c.h.b16 %v2386
        %v2739 = vunpack.c.h.b16 %v2387
        %v2740 = vunpack.c.h.b16 %v2388
        %v2741 = vunpack.c.h.b16 %v2389
        %v2742 = vunpack.c.h.b16 %v2390
        %v2743 = vunpack.c.h.b16 %v2391
        %v2744 = vunpack.c.h.b16 %v2392
        %v2745 = vunpack.c.l.b16 %v2393
        %v2746 = vunpack.c.l.b16 %v2394
        %v2747 = vunpack.c.l.b16 %v2395
        %v2748 = vunpack.c.l.b16 %v2396
        %v2749 = vunpack.c.l.b16 %v2397
        %v2750 = vunpack.c.l.b16 %v2398
        %v2751 = vunpack.c.l.b16 %v2399
        %v2752 = vunpack.c.l.b16 %v2400
        %v2753 = vunpack.c.h.b16 %v2393
        %v2754 = vunpack.c.h.b16 %v2394
        %v2755 = vunpack.c.h.b16 %v2395
        %v2756 = vunpack.c.h.b16 %v2396
        %v2757 = vunpack.c.h.b16 %v2397
        %v2758 = vunpack.c.h.b16 %v2398
        %v2759 = vunpack.c.h.b16 %v2399
        %v2760 = vunpack.c.h.b16 %v2400
        %v2761 = vunpack.c.l.b16 %v2401
        %v2762 = vunpack.c.l.b16 %v2402
        %v2763 = vunpack.c.l.b16 %v2403
        %v2764 = vunpack.c.l.b16 %v2404
        %v2765 = vunpack.c.l.b16 %v2405
        %v2766 = vunpack.c.l.b16 %v2406
        %v2767 = vunpack.c.l.b16 %v2407
        %v2768 = vunpack.c.l.b16 %v2408
        %v2769 = vunpack.c.h.b16 %v2401
        %v2770 = vunpack.c.h.b16 %v2402
        %v2771 = vunpack.c.h.b16 %v2403
        %v2772 = vunpack.c.h.b16 %v2404
        %v2773 = vunpack.c.h.b16 %v2405
        %v2774 = vunpack.c.h.b16 %v2406
        %v2775 = vunpack.c.h.b16 %v2407
        %v2776 = vunpack.c.h.b16 %v2408
        %v2777 = vunpack.c.l.b16 %v2409
        %v2778 = vunpack.c.l.b16 %v2410
        %v2779 = vunpack.c.l.b16 %v2411
        %v2780 = vunpack.c.l.b16 %v2412
        %v2781 = vunpack.c.l.b16 %v2413
        %v2782 = vunpack.c.l.b16 %v2414
        %v2783 = vunpack.c.l.b16 %v2415
        %v2784 = vunpack.c.l.b16 %v2416
        %v2785 = vunpack.c.h.b16 %v2409
        %v2786 = vunpack.c.h.b16 %v2410
        %v2787 = vunpack.c.h.b16 %v2411
        %v2788 = vunpack.c.h.b16 %v2412
        %v2789 = vunpack.c.h.b16 %v2413
        %v2790 = vunpack.c.h.b16 %v2414
        %v2791 = vunpack.c.h.b16 %v2415
        %v2792 = vunpack.c.h.b16 %v2416
        %v2793 = vunpack.c.l.b16 %v2417
        %v2794 = vunpack.c.l.b16 %v2418
        %v2795 = vunpack.c.l.b16 %v2419
        %v2796 = vunpack.c.l.b16 %v2420
        %v2797 = vunpack.c.l.b16 %v2421
        %v2798 = vunpack.c.l.b16 %v2422
        %v2799 = vunpack.c.l.b16 %v2423
        %v2800 = vunpack.c.l.b16 %v2424
        %v2801 = vunpack.c.h.b16 %v2417
        %v2802 = vunpack.c.h.b16 %v2418
        %v2803 = vunpack.c.h.b16 %v2419
        %v2804 = vunpack.c.h.b16 %v2420
        %v2805 = vunpack.c.h.b16 %v2421
        %v2806 = vunpack.c.h.b16 %v2422
        %v2807 = vunpack.c.h.b16 %v2423
        %v2808 = vunpack.c.h.b16 %v2424
        %v2809 = vpack.c.b16 %v2554, %v2553
        %v2810 = vpack.c.b16 %v2556, %v2555
        %v2811 = vpack.c.b16 %v2558, %v2557
        %v2812 = vpack.c.b16 %v2560, %v2559
        %v2813 = vpack.c.b16 %v2562, %v2561
        %v2814 = vpack.c.b16 %v2564, %v2563
        %v2815 = vpack.c.b16 %v2566, %v2565
        %v2816 = vpack.c.b16 %v2568, %v2567
        %v2817 = vpack.c.b16 %v2570, %v2569
        %v2818 = vpack.c.b16 %v2572, %v2571
        %v2819 = vpack.c.b16 %v2574, %v2573
        %v2820 = vpack.c.b16 %v2576, %v2575
        %v2821 = vpack.c.b16 %v2578, %v2577
        %v2822 = vpack.c.b16 %v2580, %v2579
        %v2823 = vpack.c.b16 %v2582, %v2581
        %v2824 = vpack.c.b16 %v2584, %v2583
        %v2825 = vpack.c.b16 %v2586, %v2585
        %v2826 = vpack.c.b16 %v2588, %v2587
        %v2827 = vpack.c.b16 %v2590, %v2589
        %v2828 = vpack.c.b16 %v2592, %v2591
        %v2829 = vpack.c.b16 %v2594, %v2593
        %v2830 = vpack.c.b16 %v2596, %v2595
        %v2831 = vpack.c.b16 %v2598, %v2597
        %v2832 = vpack.c.b16 %v2600, %v2599
        %v2833 = vpack.c.b16 %v2602, %v2601
        %v2834 = vpack.c.b16 %v2604, %v2603
        %v2835 = vpack.c.b16 %v2606, %v2605
        %v2836 = vpack.c.b16 %v2608, %v2607
        %v2837 = vpack.c.b16 %v2610, %v2609
        %v2838 = vpack.c.b16 %v2612, %v2611
        %v2839 = vpack.c.b16 %v2614, %v2613
        %v2840 = vpack.c.b16 %v2616, %v2615
        %v2841 = vpack.c.b16 %v2618, %v2617
        %v2842 = vpack.c.b16 %v2620, %v2619
        %v2843 = vpack.c.b16 %v2622, %v2621
        %v2844 = vpack.c.b16 %v2624, %v2623
        %v2845 = vpack.c.b16 %v2626, %v2625
        %v2846 = vpack.c.b16 %v2628, %v2627
        %v2847 = vpack.c.b16 %v2630, %v2629
        %v2848 = vpack.c.b16 %v2632, %v2631
        %v2849 = vpack.c.b16 %v2634, %v2633
        %v2850 = vpack.c.b16 %v2636, %v2635
        %v2851 = vpack.c.b16 %v2638, %v2637
        %v2852 = vpack.c.b16 %v2640, %v2639
        %v2853 = vpack.c.b16 %v2642, %v2641
        %v2854 = vpack.c.b16 %v2644, %v2643
        %v2855 = vpack.c.b16 %v2646, %v2645
        %v2856 = vpack.c.b16 %v2648, %v2647
        %v2857 = vpack.c.b16 %v2650, %v2649
        %v2858 = vpack.c.b16 %v2652, %v2651
        %v2859 = vpack.c.b16 %v2654, %v2653
        %v2860 = vpack.c.b16 %v2656, %v2655
        %v2861 = vpack.c.b16 %v2658, %v2657
        %v2862 = vpack.c.b16 %v2660, %v2659
        %v2863 = vpack.c.b16 %v2662, %v2661
        %v2864 = vpack.c.b16 %v2664, %v2663
        %v2865 = vpack.c.b16 %v2666, %v2665
        %v2866 = vpack.c.b16 %v2668, %v2667
        %v2867 = vpack.c.b16 %v2670, %v2669
        %v2868 = vpack.c.b16 %v2672, %v2671
        %v2869 = vpack.c.b16 %v2674, %v2673
        %v2870 = vpack.c.b16 %v2676, %v2675
        %v2871 = vpack.c.b16 %v2678, %v2677
        %v2872 = vpack.c.b16 %v2680, %v2679
        %v2873 = vpack.c.b16 %v2682, %v2681
        %v2874 = vpack.c.b16 %v2684, %v2683
        %v2875 = vpack.c.b16 %v2686, %v2685
        %v2876 = vpack.c.b16 %v2688, %v2687
        %v2877 = vpack.c.b16 %v2690, %v2689
        %v2878 = vpack.c.b16 %v2692, %v2691
        %v2879 = vpack.c.b16 %v2694, %v2693
        %v2880 = vpack.c.b16 %v2696, %v2695
        %v2881 = vpack.c.b16 %v2698, %v2697
        %v2882 = vpack.c.b16 %v2700, %v2699
        %v2883 = vpack.c.b16 %v2702, %v2701
        %v2884 = vpack.c.b16 %v2704, %v2703
        %v2885 = vpack.c.b16 %v2706, %v2705
        %v2886 = vpack.c.b16 %v2708, %v2707
        %v2887 = vpack.c.b16 %v2710, %v2709
        %v2888 = vpack.c.b16 %v2712, %v2711
        %v2889 = vpack.c.b16 %v2714, %v2713
        %v2890 = vpack.c.b16 %v2716, %v2715
        %v2891 = vpack.c.b16 %v2718, %v2717
        %v2892 = vpack.c.b16 %v2720, %v2719
        %v2893 = vpack.c.b16 %v2722, %v2721
        %v2894 = vpack.c.b16 %v2724, %v2723
        %v2895 = vpack.c.b16 %v2726, %v2725
        %v2896 = vpack.c.b16 %v2728, %v2727
        %v2897 = vpack.c.b16 %v2730, %v2729
        %v2898 = vpack.c.b16 %v2732, %v2731
        %v2899 = vpack.c.b16 %v2734, %v2733
        %v2900 = vpack.c.b16 %v2736, %v2735
        %v2901 = vpack.c.b16 %v2738, %v2737
        %v2902 = vpack.c.b16 %v2740, %v2739
        %v2903 = vpack.c.b16 %v2742, %v2741
        %v2904 = vpack.c.b16 %v2744, %v2743
        %v2905 = vpack.c.b16 %v2746, %v2745
        %v2906 = vpack.c.b16 %v2748, %v2747
        %v2907 = vpack.c.b16 %v2750, %v2749
        %v2908 = vpack.c.b16 %v2752, %v2751
        %v2909 = vpack.c.b16 %v2754, %v2753
        %v2910 = vpack.c.b16 %v2756, %v2755
        %v2911 = vpack.c.b16 %v2758, %v2757
        %v2912 = vpack.c.b16 %v2760, %v2759
        %v2913 = vpack.c.b16 %v2762, %v2761
        %v2914 = vpack.c.b16 %v2764, %v2763
        %v2915 = vpack.c.b16 %v2766, %v2765
        %v2916 = vpack.c.b16 %v2768, %v2767
        %v2917 = vpack.c.b16 %v2770, %v2769
        %v2918 = vpack.c.b16 %v2772, %v2771
        %v2919 = vpack.c.b16 %v2774, %v2773
        %v2920 = vpack.c.b16 %v2776, %v2775
        %v2921 = vpack.c.b16 %v2778, %v2777
        %v2922 = vpack.c.b16 %v2780, %v2779
        %v2923 = vpack.c.b16 %v2782, %v2781
        %v2924 = vpack.c.b16 %v2784, %v2783
        %v2925 = vpack.c.b16 %v2786, %v2785
        %v2926 = vpack.c.b16 %v2788, %v2787
        %v2927 = vpack.c.b16 %v2790, %v2789
        %v2928 = vpack.c.b16 %v2792, %v2791
        %v2929 = vpack.c.b16 %v2794, %v2793
        %v2930 = vpack.c.b16 %v2796, %v2795
        %v2931 = vpack.c.b16 %v2798, %v2797
        %v2932 = vpack.c.b16 %v2800, %v2799
        %v2933 = vpack.c.b16 %v2802, %v2801
        %v2934 = vpack.c.b16 %v2804, %v2803
        %v2935 = vpack.c.b16 %v2806, %v2805
        %v2936 = vpack.c.b16 %v2808, %v2807
        %3065 = vst [vmem:[%s261] sm:$0xff] %v2809
        %3066 = vst [vmem:[%s261 + $0x8] sm:$0xff] %v2810
        %3067 = vst [vmem:[%s261 + $0x10] sm:$0xff] %v2811
        %3068 = vst [vmem:[%s261 + $0x18] sm:$0xff] %v2812
        %3069 = vst [vmem:[%s261 + $0x20] sm:$0xff] %v2813
        %3070 = vst [vmem:[%s261 + $0x28] sm:$0xff] %v2814
        %3071 = vst [vmem:[%s261 + $0x30] sm:$0xff] %v2815
        %3072 = vst [vmem:[%s261 + $0x38] sm:$0xff] %v2816
        %3073 = vst [vmem:[%s261 + $0x40] sm:$0xff] %v2817
        %3074 = vst [vmem:[%s261 + $0x48] sm:$0xff] %v2818
        %3075 = vst [vmem:[%s261 + $0x50] sm:$0xff] %v2819
        %3076 = vst [vmem:[%s261 + $0x58] sm:$0xff] %v2820
        %3077 = vst [vmem:[%s261 + $0x60] sm:$0xff] %v2821
        %3078 = vst [vmem:[%s261 + $0x68] sm:$0xff] %v2822
        %3079 = vst [vmem:[%s261 + $0x70] sm:$0xff] %v2823
        %3080 = vst [vmem:[%s261 + $0x78] sm:$0xff] %v2824
        %3081 = vst [vmem:[%s261 + $0x80] sm:$0xff] %v2825
        %3082 = vst [vmem:[%s261 + $0x88] sm:$0xff] %v2826
        %3083 = vst [vmem:[%s261 + $0x90] sm:$0xff] %v2827
        %3084 = vst [vmem:[%s261 + $0x98] sm:$0xff] %v2828
        %3085 = vst [vmem:[%s261 + $0xa0] sm:$0xff] %v2829
        %3086 = vst [vmem:[%s261 + $0xa8] sm:$0xff] %v2830
        %3087 = vst [vmem:[%s261 + $0xb0] sm:$0xff] %v2831
        %3088 = vst [vmem:[%s261 + $0xb8] sm:$0xff] %v2832
        %3089 = vst [vmem:[%s261 + $0xc0] sm:$0xff] %v2833
        %3090 = vst [vmem:[%s261 + $0xc8] sm:$0xff] %v2834
        %3091 = vst [vmem:[%s261 + $0xd0] sm:$0xff] %v2835
        %3092 = vst [vmem:[%s261 + $0xd8] sm:$0xff] %v2836
        %3093 = vst [vmem:[%s261 + $0xe0] sm:$0xff] %v2837
        %3094 = vst [vmem:[%s261 + $0xe8] sm:$0xff] %v2838
        %3095 = vst [vmem:[%s261 + $0xf0] sm:$0xff] %v2839
        %3096 = vst [vmem:[%s261 + $0xf8] sm:$0xff] %v2840
        %3097 = vst [vmem:[%s261 + $0x100] sm:$0xff] %v2841
        %3098 = vst [vmem:[%s261 + $0x108] sm:$0xff] %v2842
        %3099 = vst [vmem:[%s261 + $0x110] sm:$0xff] %v2843
        %3100 = vst [vmem:[%s261 + $0x118] sm:$0xff] %v2844
        %3101 = vst [vmem:[%s261 + $0x120] sm:$0xff] %v2845
        %3102 = vst [vmem:[%s261 + $0x128] sm:$0xff] %v2846
        %3103 = vst [vmem:[%s261 + $0x130] sm:$0xff] %v2847
        %3104 = vst [vmem:[%s261 + $0x138] sm:$0xff] %v2848
        %3105 = vst [vmem:[%s261 + $0x140] sm:$0xff] %v2849
        %3106 = vst [vmem:[%s261 + $0x148] sm:$0xff] %v2850
        %3107 = vst [vmem:[%s261 + $0x150] sm:$0xff] %v2851
        %3108 = vst [vmem:[%s261 + $0x158] sm:$0xff] %v2852
        %3109 = vst [vmem:[%s261 + $0x160] sm:$0xff] %v2853
        %3110 = vst [vmem:[%s261 + $0x168] sm:$0xff] %v2854
        %3111 = vst [vmem:[%s261 + $0x170] sm:$0xff] %v2855
        %3112 = vst [vmem:[%s261 + $0x178] sm:$0xff] %v2856
        %3113 = vst [vmem:[%s261 + $0x180] sm:$0xff] %v2857
        %3114 = vst [vmem:[%s261 + $0x188] sm:$0xff] %v2858
        %3115 = vst [vmem:[%s261 + $0x190] sm:$0xff] %v2859
        %3116 = vst [vmem:[%s261 + $0x198] sm:$0xff] %v2860
        %3117 = vst [vmem:[%s261 + $0x1a0] sm:$0xff] %v2861
        %3118 = vst [vmem:[%s261 + $0x1a8] sm:$0xff] %v2862
        %3119 = vst [vmem:[%s261 + $0x1b0] sm:$0xff] %v2863
        %3120 = vst [vmem:[%s261 + $0x1b8] sm:$0xff] %v2864
        %3121 = vst [vmem:[%s261 + $0x1c0] sm:$0xff] %v2865
        %3122 = vst [vmem:[%s261 + $0x1c8] sm:$0xff] %v2866
        %3123 = vst [vmem:[%s261 + $0x1d0] sm:$0xff] %v2867
        %3124 = vst [vmem:[%s261 + $0x1d8] sm:$0xff] %v2868
        %3125 = vst [vmem:[%s261 + $0x1e0] sm:$0xff] %v2869
        %3126 = vst [vmem:[%s261 + $0x1e8] sm:$0xff] %v2870
        %3127 = vst [vmem:[%s261 + $0x1f0] sm:$0xff] %v2871
        %3128 = vst [vmem:[%s261 + $0x1f8] sm:$0xff] %v2872
        %3129 = vst [vmem:[%s261 + $0x200] sm:$0xff] %v2873
        %3130 = vst [vmem:[%s261 + $0x208] sm:$0xff] %v2874
        %3131 = vst [vmem:[%s261 + $0x210] sm:$0xff] %v2875
        %3132 = vst [vmem:[%s261 + $0x218] sm:$0xff] %v2876
        %3133 = vst [vmem:[%s261 + $0x220] sm:$0xff] %v2877
        %3134 = vst [vmem:[%s261 + $0x228] sm:$0xff] %v2878
        %3135 = vst [vmem:[%s261 + $0x230] sm:$0xff] %v2879
        %3136 = vst [vmem:[%s261 + $0x238] sm:$0xff] %v2880
        %3137 = vst [vmem:[%s261 + $0x240] sm:$0xff] %v2881
        %3138 = vst [vmem:[%s261 + $0x248] sm:$0xff] %v2882
        %3139 = vst [vmem:[%s261 + $0x250] sm:$0xff] %v2883
        %3140 = vst [vmem:[%s261 + $0x258] sm:$0xff] %v2884
        %3141 = vst [vmem:[%s261 + $0x260] sm:$0xff] %v2885
        %3142 = vst [vmem:[%s261 + $0x268] sm:$0xff] %v2886
        %3143 = vst [vmem:[%s261 + $0x270] sm:$0xff] %v2887
        %3144 = vst [vmem:[%s261 + $0x278] sm:$0xff] %v2888
        %3145 = vst [vmem:[%s261 + $0x280] sm:$0xff] %v2889
        %3146 = vst [vmem:[%s261 + $0x288] sm:$0xff] %v2890
        %3147 = vst [vmem:[%s261 + $0x290] sm:$0xff] %v2891
        %3148 = vst [vmem:[%s261 + $0x298] sm:$0xff] %v2892
        %3149 = vst [vmem:[%s261 + $0x2a0] sm:$0xff] %v2893
        %3150 = vst [vmem:[%s261 + $0x2a8] sm:$0xff] %v2894
        %3151 = vst [vmem:[%s261 + $0x2b0] sm:$0xff] %v2895
        %3152 = vst [vmem:[%s261 + $0x2b8] sm:$0xff] %v2896
        %3153 = vst [vmem:[%s261 + $0x2c0] sm:$0xff] %v2897
        %3154 = vst [vmem:[%s261 + $0x2c8] sm:$0xff] %v2898
        %3155 = vst [vmem:[%s261 + $0x2d0] sm:$0xff] %v2899
        %3156 = vst [vmem:[%s261 + $0x2d8] sm:$0xff] %v2900
        %3157 = vst [vmem:[%s261 + $0x2e0] sm:$0xff] %v2901
        %3158 = vst [vmem:[%s261 + $0x2e8] sm:$0xff] %v2902
        %3159 = vst [vmem:[%s261 + $0x2f0] sm:$0xff] %v2903
        %3160 = vst [vmem:[%s261 + $0x2f8] sm:$0xff] %v2904
        %3161 = vst [vmem:[%s261 + $0x300] sm:$0xff] %v2905
        %3162 = vst [vmem:[%s261 + $0x308] sm:$0xff] %v2906
        %3163 = vst [vmem:[%s261 + $0x310] sm:$0xff] %v2907
        %3164 = vst [vmem:[%s261 + $0x318] sm:$0xff] %v2908
        %3165 = vst [vmem:[%s261 + $0x320] sm:$0xff] %v2909
        %3166 = vst [vmem:[%s261 + $0x328] sm:$0xff] %v2910
        %3167 = vst [vmem:[%s261 + $0x330] sm:$0xff] %v2911
        %3168 = vst [vmem:[%s261 + $0x338] sm:$0xff] %v2912
        %3169 = vst [vmem:[%s261 + $0x340] sm:$0xff] %v2913
        %3170 = vst [vmem:[%s261 + $0x348] sm:$0xff] %v2914
        %3171 = vst [vmem:[%s261 + $0x350] sm:$0xff] %v2915
        %3172 = vst [vmem:[%s261 + $0x358] sm:$0xff] %v2916
        %3173 = vst [vmem:[%s261 + $0x360] sm:$0xff] %v2917
        %3174 = vst [vmem:[%s261 + $0x368] sm:$0xff] %v2918
        %3175 = vst [vmem:[%s261 + $0x370] sm:$0xff] %v2919
        %3176 = vst [vmem:[%s261 + $0x378] sm:$0xff] %v2920
        %3177 = vst [vmem:[%s261 + $0x380] sm:$0xff] %v2921
        %3178 = vst [vmem:[%s261 + $0x388] sm:$0xff] %v2922
        %3179 = vst [vmem:[%s261 + $0x390] sm:$0xff] %v2923
        %3180 = vst [vmem:[%s261 + $0x398] sm:$0xff] %v2924
        %3181 = vst [vmem:[%s261 + $0x3a0] sm:$0xff] %v2925
        %3182 = vst [vmem:[%s261 + $0x3a8] sm:$0xff] %v2926
        %3183 = vst [vmem:[%s261 + $0x3b0] sm:$0xff] %v2927
        %3184 = vst [vmem:[%s261 + $0x3b8] sm:$0xff] %v2928
        %3185 = vst [vmem:[%s261 + $0x3c0] sm:$0xff] %v2929
        %3186 = vst [vmem:[%s261 + $0x3c8] sm:$0xff] %v2930
        %3187 = vst [vmem:[%s261 + $0x3d0] sm:$0xff] %v2931
        %3188 = vst [vmem:[%s261 + $0x3d8] sm:$0xff] %v2932
        %3189 = vst [vmem:[%s261 + $0x3e0] sm:$0xff] %v2933
        %3190 = vst [vmem:[%s261 + $0x3e8] sm:$0xff] %v2934
        %3191 = vst [vmem:[%s261 + $0x3f0] sm:$0xff] %v2935
        %3192 = vst [vmem:[%s261 + $0x3f8] sm:$0xff] %v2936
        %s3193 = sand.u32 %s121, 1
        %s3194 = scalar_lea.sflag [#allocation4], %s3193
        %s3195 = sand.u32 %s121, 1
        %s3196 = smul.addr %s3195, 1024
        %s3197 = scalar_lea.vmem [#allocation8], %s3196
        // Predicated region
        $region45: #{tpu_custom_call.1} parent=31 // pred_check
          %p3198 = pneg %p131
        $region46: #{tpu_custom_call.1} parent=31 // pred_check_branch
          %3200 = sbr.rel (%p3198) target = $region48
        $region47: #{tpu_custom_call.1} parent=31 // pred_region
          %s3201 = smul.u32 32, %s25
          %s3202 = smul.u32 8, %s26
          %s3204 = ssub.s32 16384, 16384
          %3205 = vsyncadd %s3194, %s3204
          %s3206 = smul.addr %s3201, 16
          %s3207 = sadd.s32 %s3202, %s3206
          %s3208 = smul.addr %s3207, 64
          %s3209 = scalar_lea.hbm %s3, %s3208
          %s3210 = sshll.u32 %s3197, 4
          %s3211 = int_to_ptr.vmem [resolvable:$true] %s3210
          %3216 = dma.vmem_to_hbm [thread:$0]  %s3211, 16384, %s3209, %s3194, 512, 1024, 32
        $region48: #{tpu_custom_call.1} parent=31 // pred_fallthru
          _
      $region32: #{tpu_custom_call.1} parent=5 // pred_fallthru
        _
      %p3217 = scmp.le.s32.totalorder 2, %s16
      // Predicated region
      $region49: #{tpu_custom_call.1} parent=5 // pred_check
        %p3218 = pneg %p3217
      $region50: #{tpu_custom_call.1} parent=5 // pred_check_branch
        %3220 = sbr.rel (%p3218) target = $region52
      $region51: #{tpu_custom_call.1} parent=5 // pred_region
        %s3221 = ssub.s32 %s16, 2
        // Predicated region
        $region53: #{tpu_custom_call.1} parent=51 // pred_check
          %p3222 = pneg %p137
        $region54: #{tpu_custom_call.1} parent=51 // pred_check_branch
          %3224 = sbr.rel (%p3222) target = $region56
        $region55: #{tpu_custom_call.1} parent=51 // pred_region
          %s3225 = sand.u32 %s122, 1
          %s3226 = scalar_lea.sflag [#allocation4], %s3225
          %s3227 = sand.u32 %s122, 1
          %s3228 = smul.addr %s3227, 1024
          %s3229 = scalar_lea.vmem [#allocation8], %s3228
          %3230 = dma.done %s3226, 16384
        $region56: #{tpu_custom_call.1} parent=51 // pred_fallthru
          _
      $region52: #{tpu_custom_call.1} parent=5 // pred_fallthru
        _
    $region6: #{tpu_custom_call.1} parent=1 // loop_footer
      %s20 = sadd.s32 1, %s16
    $region7: #{tpu_custom_call.1} parent=1 // loop_footer_branch
      %15 = sbr.rel target = $region3
    $region8: #{tpu_custom_call.1} parent=1 // loop_exit
      _
    %3231 = vsyncpa [#allocation3], 1
    %s3232 = scalar_lea.sflag [#allocation3], 1
    %3233 = vsyncpa %s3232, 1
    %3234 = vsyncpa [#allocation6], 1
    %s3235 = scalar_lea.sflag [#allocation6], 1
    %3236 = vsyncpa %s3235, 1
    %3237 = vsyncpa [#allocation4], 1
    %s3238 = scalar_lea.sflag [#allocation4], 1
    %3239 = vsyncpa %s3238, 1

</llo_original>
